<compile_context>
chip_gen: v5e
topology: v5e:2x2
jax: 0.10.0
libtpu: 0.0.40
codegen_flags: <defaults>
</compile_context>

<pallas_src>
import jax
import jax.numpy as jnp
from jax.experimental import pallas as pl
from jax.experimental.pallas import tpu as pltpu


def shallow_nn_kernel(x_ref, w1t_ref, b1_ref, w2_ref, b2_ref, o_ref):
    # x_ref:  [TB, D] f32   w1t_ref: [D, H] bf16
    # b1_ref: [1, H]  f32   w2_ref:  [1, H] f32   b2_ref: [1] f32 (SMEM)
    # o_ref:  [TB, 1] f32
    xb = x_ref[...].astype(jnp.bfloat16)                       # VPU cast, in-VMEM
    h = jnp.dot(xb, w1t_ref[...],
                preferred_element_type=jnp.float32)            # MXU: [TB, H] f32
    h = jnp.maximum(h + b1_ref[...], 0.0)                      # bias + ReLU (f32 VPU)
    z = jnp.sum(h * w2_ref[...], axis=-1, keepdims=True)       # fc2: VPU mul + lane reduce
    z = z + b2_ref[0]                                          # scalar bias from SMEM
    o_ref[...] = jax.nn.sigmoid(z).astype(o_ref.dtype)         # EUP sigmoid, f32


def shallow_nn_forward(x, w1, b1, w2, b2, *, tile_b=4096):
    """Forward pass of ShallowNNClassifier.

    x:  [B, D] float32 activations (read in place, no wrapper copy).
    w1: [H, D] fc1.weight (PyTorch layout),  b1: [H] fc1.bias
    w2: [1, H] fc2.weight,                   b2: [1] fc2.bias
    Returns [B, 1] float32 probabilities.
    """
    B, D = x.shape
    H = w1.shape[0]

    # Tile selection: one block for small batches, otherwise sublane-aligned
    # blocks of at most tile_b rows.  Partial last block is masked by Pallas,
    # so no padding copy of x is ever made.  For B > tile_b this automatically
    # gives >= 2 grid steps (keeps both v7x TensorCores busy).
    tile = min(tile_b, B)
    if tile < B:
        tile = max(8, (tile // 8) * 8)
    num_tiles = pl.cdiv(B, tile)

    # Tiny one-off parameter reshapes/casts (a few hundred bytes).
    w1t = w1.T.astype(jnp.bfloat16)                 # [D, H]
    b1r = b1.reshape(1, H).astype(jnp.float32)      # [1, H]
    w2r = w2.reshape(1, H).astype(jnp.float32)      # [1, H]
    b2s = b2.reshape(1).astype(jnp.float32)         # [1]  -> SMEM

    flops = 2 * B * D * H + 4 * B * H + 2 * B
    bytes_accessed = (x.size * 4 + w1t.size * 2
                      + (b1r.size + w2r.size + b2s.size) * 4 + B * 4)

    return pl.pallas_call(
        shallow_nn_kernel,
        out_shape=jax.ShapeDtypeStruct((B, 1), jnp.float32),
        grid=(num_tiles,),
        in_specs=[
            # x: pipelined (double-buffered) f32 blocks straight from HBM.
            pl.BlockSpec((tile, D), lambda i: (i, 0)),
            # Weights / biases: constant block index -> VMEM-resident.
            pl.BlockSpec((D, H), lambda i: (0, 0)),
            pl.BlockSpec((1, H), lambda i: (0, 0)),
            pl.BlockSpec((1, H), lambda i: (0, 0)),
            # fc2 bias as a scalar in SMEM.
            pl.BlockSpec(memory_space=pltpu.MemorySpace.SMEM),
        ],
        out_specs=pl.BlockSpec((tile, 1), lambda i: (i, 0)),
        compiler_params=pltpu.CompilerParams(
            dimension_semantics=("parallel",),
            vmem_limit_bytes=32 * 1024 * 1024),
        cost_estimate=pl.CostEstimate(
            flops=flops, transcendentals=B, bytes_accessed=bytes_accessed),
    )(x, w1t, b1r, w2r, b2s)


def init_params(key, input_dim, hidden_dim=8):
    """Deterministic init mirroring nn.Linear ([out, in] weight layout)."""
    k1, k2, k3, k4 = jax.random.split(key, 4)
    bound1 = 1.0 / jnp.sqrt(input_dim)
    bound2 = 1.0 / jnp.sqrt(hidden_dim)
    w1 = jax.random.uniform(k1, (hidden_dim, input_dim), jnp.float32,
                            -bound1, bound1)
    b1 = jax.random.uniform(k2, (hidden_dim,), jnp.float32, -bound1, bound1)
    w2 = jax.random.uniform(k3, (1, hidden_dim), jnp.float32, -bound2, bound2)
    b2 = jax.random.uniform(k4, (1,), jnp.float32, -bound2, bound2)
    return w1, b1, w2, b2


if __name__ == "__main__":
    key = jax.random.PRNGKey(0)
    kx, kp = jax.random.split(key)

    batch, input_dim, hidden_dim = 1000, 16, 8
    x = jax.random.normal(kx, (batch, input_dim), jnp.float32)
    w1, b1, w2, b2 = init_params(kp, input_dim, hidden_dim)

    # Small tile here so the test exercises a multi-step grid and the masked
    # partial tail block (1000 = 3*256 + 232).  Production default is 4096.
    fwd = jax.jit(shallow_nn_forward, static_argnames=("tile_b",))
    out = jax.block_until_ready(fwd(x, w1, b1, w2, b2, tile_b=256))

    # Reference with matched bf16 rounding of x/w1 (f32 accumulation), plain JAX.
    xb = x.astype(jnp.bfloat16).astype(jnp.float32)
    w1b = w1.astype(jnp.bfloat16).astype(jnp.float32)
    hidden = jnp.maximum(
        jnp.dot(xb, w1b.T, precision=jax.lax.Precision.HIGHEST) + b1, 0.0)
    ref = jax.nn.sigmoid(jnp.sum(hidden * w2[0], axis=-1, keepdims=True) + b2)

    assert out.shape == (batch, 1)
    assert bool(jnp.allclose(out, ref, atol=1e-4)), "mismatch vs JAX reference"

    print("KERNEL_OK")
</pallas_src>

<mosaic_0001>
module attributes {stable_mosaic.version = 11 : i64} {
  func.func @shallow_nn_kernel(%arg0: i32, %arg1: memref<256x16xf32, #tpu.memory_space<vmem>>, %arg2: memref<16x8xbf16, #tpu.memory_space<vmem>>, %arg3: memref<1x8xf32, #tpu.memory_space<vmem>>, %arg4: memref<1x8xf32, #tpu.memory_space<vmem>>, %arg5: memref<1xf32, #tpu.memory_space<smem>>, %arg6: memref<256x1xf32, #tpu.memory_space<vmem>>) attributes {dimension_semantics = [#tpu.dimension_semantics<parallel>], iteration_bounds = array<i64: 4>, scalar_prefetch = 0 : i64, scratch_operands = 0 : i64, tpu.core_type = #tpu.core_type<tc>, window_params = [{transform_indices = @transform_0, window_bounds = array<i64: 256, 16>}, {pipeline_mode = #tpu.pipeline_mode<synchronous>, transform_indices = @transform_1, window_bounds = array<i64: 16, 8>}, {pipeline_mode = #tpu.pipeline_mode<synchronous>, transform_indices = @transform_2, window_bounds = array<i64: 1, 8>}, {pipeline_mode = #tpu.pipeline_mode<synchronous>, transform_indices = @transform_3, window_bounds = array<i64: 1, 8>}, {transform_indices = @transform_4, window_bounds = array<i64: 1>}, {transform_indices = @transform_5, window_bounds = array<i64: 256, 1>}]} {
    %c0 = arith.constant 0 : index
    %c0_0 = arith.constant 0 : index
    %0 = vector.load %arg1[%c0, %c0_0] : memref<256x16xf32, #tpu.memory_space<vmem>>, vector<256x16xf32>
    %1 = arith.truncf %0 : vector<256x16xf32> to vector<256x16xbf16>
    %c0_1 = arith.constant 0 : index
    %c0_2 = arith.constant 0 : index
    %2 = vector.load %arg2[%c0_1, %c0_2] : memref<16x8xbf16, #tpu.memory_space<vmem>>, vector<16x8xbf16>
    %cst = arith.constant dense<0.000000e+00> : vector<256x8xf32>
    %3 = tpu.matmul %1, %2, %cst {dimension_numbers = #tpu.dot_dimension_numbers<[1], [0], [0], [1], [0, 0, 1, 1], [], []>} : vector<256x16xbf16>, vector<16x8xbf16>, vector<256x8xf32> -> vector<256x8xf32>
    %c0_3 = arith.constant 0 : index
    %c0_4 = arith.constant 0 : index
    %4 = vector.load %arg3[%c0_3, %c0_4] : memref<1x8xf32, #tpu.memory_space<vmem>>, vector<1x8xf32>
    %5 = vector.broadcast %4 : vector<1x8xf32> to vector<256x8xf32>
    %6 = arith.addf %3, %5 : vector<256x8xf32>
    %cst_5 = arith.constant 0.000000e+00 : f32
    %7 = vector.broadcast %cst_5 : f32 to vector<256x8xf32>
    %8 = arith.maximumf %6, %7 : vector<256x8xf32>
    %c0_6 = arith.constant 0 : index
    %c0_7 = arith.constant 0 : index
    %9 = vector.load %arg4[%c0_6, %c0_7] : memref<1x8xf32, #tpu.memory_space<vmem>>, vector<1x8xf32>
    %10 = vector.broadcast %9 : vector<1x8xf32> to vector<256x8xf32>
    %11 = arith.mulf %8, %10 : vector<256x8xf32>
    %cst_8 = arith.constant dense<0.000000e+00> : vector<256xf32>
    %12 = vector.multi_reduction <add>, %11, %cst_8 [1] : vector<256x8xf32> to vector<256xf32>
    %13 = vector.shape_cast %12 : vector<256xf32> to vector<256x1xf32>
    %c0_9 = arith.constant 0 : index
    %14 = memref.load %arg5[%c0_9] : memref<1xf32, #tpu.memory_space<smem>>
    %15 = vector.broadcast %14 : f32 to vector<256x1xf32>
    %16 = arith.addf %13, %15 : vector<256x1xf32>
    %17 = arith.negf %16 : vector<256x1xf32>
    %18 = math.exp %17 : vector<256x1xf32>
    %cst_10 = arith.constant 1.000000e+00 : f32
    %19 = vector.broadcast %cst_10 : f32 to vector<256x1xf32>
    %20 = arith.addf %19, %18 : vector<256x1xf32>
    %21 = arith.divf %19, %20 : vector<256x1xf32>
    %c0_11 = arith.constant 0 : index
    %c0_12 = arith.constant 0 : index
    %22 = vector.load %arg6[%c0_11, %c0_12] : memref<256x1xf32, #tpu.memory_space<vmem>>, vector<256x1xf32>
    tpu.vector_store %arg6[%c0_11, %c0_12], %21 {strides = array<i32>} : memref<256x1xf32, #tpu.memory_space<vmem>>, vector<256x1xf32>,
    return
  }
  func.func @transform_0(%arg0: i32) -> (i32, i32) {
    %c0_i32 = arith.constant 0 : i32
    %c0_i32_0 = arith.constant 0 : i32
    return %arg0, %c0_i32 : i32, i32
  }
  func.func @transform_1(%arg0: i32) -> (i32, i32) {
    %c0_i32 = arith.constant 0 : i32
    %c0_i32_0 = arith.constant 0 : i32
    %c0_i32_1 = arith.constant 0 : i32
    return %c0_i32, %c0_i32_0 : i32, i32
  }
  func.func @transform_2(%arg0: i32) -> (i32, i32) {
    %c0_i32 = arith.constant 0 : i32
    %c0_i32_0 = arith.constant 0 : i32
    %c0_i32_1 = arith.constant 0 : i32
    return %c0_i32, %c0_i32_0 : i32, i32
  }
  func.func @transform_3(%arg0: i32) -> (i32, i32) {
    %c0_i32 = arith.constant 0 : i32
    %c0_i32_0 = arith.constant 0 : i32
    %c0_i32_1 = arith.constant 0 : i32
    return %c0_i32, %c0_i32_0 : i32, i32
  }
  func.func @transform_4(%arg0: i32) -> i32 {
    %c0_i32 = arith.constant 0 : i32
    %c0_i32_0 = arith.constant 0 : i32
    return %c0_i32 : i32
  }
  func.func @transform_5(%arg0: i32) -> (i32, i32) {
    %c0_i32 = arith.constant 0 : i32
    %c0_i32_0 = arith.constant 0 : i32
    return %arg0, %c0_i32 : i32, i32
  }
}

</mosaic_0001>

<llo_original>
// kernel: shallow_nn_forward.1
$region0: #{shallow_nn_forward.1}
  #allocation0 [shape = 'u32[]', space=smem, size = 0x4, offset = 0x4, fixed_abs, tag = 'smem constant byte address 0x4 - core index']
  #allocation1 [shape = 'u32[72,128]{1,0:T(1,128)}', space=vmem, size = 0x9000, scoped, tag = 'internal scratch']
  #allocation2 [shape = 'f32[1]{0:T(128)S(6)}', space=smem, size = 0x200, scoped, tag = 'scoped memory for shallow_nn_forward.1']
  %s0 = inlined_call_operand.vmem [shape: f32[1000,16], index: 0, kind: input, shape index: {}]
  %s1 = inlined_call_operand.vmem [shape: bf16[16,8], index: 1, kind: input, shape index: {}]
  %s2 = inlined_call_operand.vmem [shape: f32[1,8], index: 2, kind: input, shape index: {}]
  %s3 = inlined_call_operand.vmem [shape: f32[1,8], index: 3, kind: input, shape index: {}]
  %s4 = inlined_call_operand.<no memory space> [shape: f32[1], index: 4, kind: input, shape index: {}]
  %s5 = inlined_call_operand.vmem [shape: f32[1000,1], index: 5, kind: output, shape index: {}]
  %s6 = sld [smem:[#allocation0]]
  $region101: #{shallow_nn_forward.1} parent=0
    _
  %s8 = ssub.s32 1, %s6
  %s9 = scalar_select 0, %s8, %s6
  %10 = sst [smem:[#allocation2]] %s4
  $region1: #{shallow_nn_forward.1} parent=0
    #allocation3 [shape = 'u8[262144]{0}', space=vmem, size = 0x40000, scoped, tag = 'output window, operand 0']
    loop: start=0, step=1, limit=6
    $region2: #{shallow_nn_forward.1} parent=1 // loop_pre_header
      _
    $region3: #{shallow_nn_forward.1} parent=1 // loop_header
      %s12 = sphi 0, %s16
      %p13 = scmp.ge.s32.totalorder %s12, 6
      %s22 = sphi 0, %s24
      %s25 = sphi 0, %s22
      %s26 = sphi 0, %s25
      %s42 = sphi 0, %s26
      %s46 = sphi 0, %s46
      %s48 = sphi 0, %s46
      %s49 = sphi 0, %s48
      %s63 = sphi 0, %s49
      %s67 = sphi 0, %s67
      %s69 = sphi 0, %s67
      %s70 = sphi 0, %s69
      %s84 = sphi 0, %s70
      %s88 = sphi 0, %s88
      %s90 = sphi 0, %s88
      %s91 = sphi 0, %s90
      %s105 = sphi 0, %s91
      %s109 = sphi 0, %s109
      %s111 = sphi 0, %s109
      %s112 = sphi 0, %s111
      %s126 = sphi 0, %s112
      %s132 = sphi 0, %s134
      %s135 = sphi 0, %s132
      %s136 = sphi 0, %s135
      %s152 = sphi 0, %s136
    $region4: #{shallow_nn_forward.1} parent=1 // loop_header_branch
      %15 = sbr.rel (%p13) target = $region8
    $region5: #{shallow_nn_forward.1} parent=1 // loop_body
      %s17 = ssub.s32 %s12, 1
      %s18 = ssub.s32 %s12, 2
      %s19 = sadd.s32 %s12, 1
      %s20 = ssub.s32 %s12, %s19
      %p21 = scmp.eq.s32.totalorder %s20, 0
      %s23 = sadd.s32 %s22, 1
      %s24 = scalar_select %p21, %s22, %s23
      %p27 = pneg %p21
      %p28 = scmp.eq.s32.totalorder %s12, 3
      %p29 = por %p27, %p28
      %p30 = scmp.ne.s32.totalorder %s22, %s25
      %p31 = scmp.eq.s32.totalorder %s12, 0
      %p32 = por %p30, %p31
      %p33 = scmp.ne.s32.totalorder %s22, %s25
      %p34 = scmp.eq.s32.totalorder %s17, 3
      %p35 = por %p33, %p34
      %p36 = scmp.ne.s32.totalorder %s25, %s26
      %p37 = scmp.eq.s32.totalorder %s17, 0
      %p38 = por %p36, %p37
      %p39 = scmp.ne.s32.totalorder %s25, %s26
      %p40 = scmp.eq.s32.totalorder %s18, 3
      %p41 = por %p39, %p40
      %p43 = scmp.ne.s32.totalorder %s26, %s42
      %p44 = scmp.eq.s32.totalorder %s18, 0
      %p45 = por %p43, %p44
      %s47 = sadd.s32 %s46, 1
      %p50 = scmp.eq.s32.totalorder %s12, 3
      %p51 = scmp.ne.s32.totalorder %s46, %s48
      %p52 = scmp.eq.s32.totalorder %s12, 0
      %p53 = por %p51, %p52
      %p54 = scmp.ne.s32.totalorder %s46, %s48
      %p55 = scmp.eq.s32.totalorder %s17, 3
      %p56 = por %p54, %p55
      %p57 = scmp.ne.s32.totalorder %s48, %s49
      %p58 = scmp.eq.s32.totalorder %s17, 0
      %p59 = por %p57, %p58
      %p60 = scmp.ne.s32.totalorder %s48, %s49
      %p61 = scmp.eq.s32.totalorder %s18, 3
      %p62 = por %p60, %p61
      %p64 = scmp.ne.s32.totalorder %s49, %s63
      %p65 = scmp.eq.s32.totalorder %s18, 0
      %p66 = por %p64, %p65
      %s68 = sadd.s32 %s67, 1
      %p71 = scmp.eq.s32.totalorder %s12, 3
      %p72 = scmp.ne.s32.totalorder %s67, %s69
      %p73 = scmp.eq.s32.totalorder %s12, 0
      %p74 = por %p72, %p73
      %p75 = scmp.ne.s32.totalorder %s67, %s69
      %p76 = scmp.eq.s32.totalorder %s17, 3
      %p77 = por %p75, %p76
      %p78 = scmp.ne.s32.totalorder %s69, %s70
      %p79 = scmp.eq.s32.totalorder %s17, 0
      %p80 = por %p78, %p79
      %p81 = scmp.ne.s32.totalorder %s69, %s70
      %p82 = scmp.eq.s32.totalorder %s18, 3
      %p83 = por %p81, %p82
      %p85 = scmp.ne.s32.totalorder %s70, %s84
      %p86 = scmp.eq.s32.totalorder %s18, 0
      %p87 = por %p85, %p86
      %s89 = sadd.s32 %s88, 1
      %p92 = scmp.eq.s32.totalorder %s12, 3
      %p93 = scmp.ne.s32.totalorder %s88, %s90
      %p94 = scmp.eq.s32.totalorder %s12, 0
      %p95 = por %p93, %p94
      %p96 = scmp.ne.s32.totalorder %s88, %s90
      %p97 = scmp.eq.s32.totalorder %s17, 3
      %p98 = por %p96, %p97
      %p99 = scmp.ne.s32.totalorder %s90, %s91
      %p100 = scmp.eq.s32.totalorder %s17, 0
      %p101 = por %p99, %p100
      %p102 = scmp.ne.s32.totalorder %s90, %s91
      %p103 = scmp.eq.s32.totalorder %s18, 3
      %p104 = por %p102, %p103
      %p106 = scmp.ne.s32.totalorder %s91, %s105
      %p107 = scmp.eq.s32.totalorder %s18, 0
      %p108 = por %p106, %p107
      %s110 = sadd.s32 %s109, 1
      %p113 = scmp.eq.s32.totalorder %s12, 3
      %p114 = scmp.ne.s32.totalorder %s109, %s111
      %p115 = scmp.eq.s32.totalorder %s12, 0
      %p116 = por %p114, %p115
      %p117 = scmp.ne.s32.totalorder %s109, %s111
      %p118 = scmp.eq.s32.totalorder %s17, 3
      %p119 = por %p117, %p118
      %p120 = scmp.ne.s32.totalorder %s111, %s112
      %p121 = scmp.eq.s32.totalorder %s17, 0
      %p122 = por %p120, %p121
      %p123 = scmp.ne.s32.totalorder %s111, %s112
      %p124 = scmp.eq.s32.totalorder %s18, 3
      %p125 = por %p123, %p124
      %p127 = scmp.ne.s32.totalorder %s112, %s126
      %p128 = scmp.eq.s32.totalorder %s18, 0
      %p129 = por %p127, %p128
      %s130 = ssub.s32 %s12, %s19
      %p131 = scmp.eq.s32.totalorder %s130, 0
      %s133 = sadd.s32 %s132, 1
      %s134 = scalar_select %p131, %s132, %s133
      %p137 = pneg %p131
      %p138 = scmp.eq.s32.totalorder %s12, 3
      %p139 = por %p137, %p138
      %p140 = scmp.ne.s32.totalorder %s132, %s135
      %p141 = scmp.eq.s32.totalorder %s12, 0
      %p142 = por %p140, %p141
      %p143 = scmp.ne.s32.totalorder %s132, %s135
      %p144 = scmp.eq.s32.totalorder %s17, 3
      %p145 = por %p143, %p144
      %p146 = scmp.ne.s32.totalorder %s135, %s136
      %p147 = scmp.eq.s32.totalorder %s17, 0
      %p148 = por %p146, %p147
      %p149 = scmp.ne.s32.totalorder %s135, %s136
      %p150 = scmp.eq.s32.totalorder %s18, 3
      %p151 = por %p149, %p150
      %p153 = scmp.ne.s32.totalorder %s136, %s152
      %p154 = scmp.eq.s32.totalorder %s18, 0
      %p155 = por %p153, %p154
      %p156 = scmp.le.s32.totalorder 1, %s12
      %p157 = scmp.lt.s32.totalorder %s12, 5
      %p158 = pnand %p156, %p157
      %p159 = pneg %p158
      // Predicated region
      $region9: #{shallow_nn_forward.1} parent=5 // pred_check
        _
      $region10: #{shallow_nn_forward.1} parent=5 // pred_check_branch
        %161 = sbr.rel (%p158) target = $region12
      $region11: #{shallow_nn_forward.1} parent=5 // pred_region
        %s162 = ssub.s32 %s12, 1
        // Predicated region
        $region13: #{shallow_nn_forward.1} parent=11 // pred_check
          %p163 = pneg %p59
        $region14: #{shallow_nn_forward.1} parent=11 // pred_check_branch
          %165 = sbr.rel (%p163) target = $region16
        $region15: #{shallow_nn_forward.1} parent=11 // pred_region
          _
        $region16: #{shallow_nn_forward.1} parent=11 // pred_fallthru
          _
        // Predicated region
        $region17: #{shallow_nn_forward.1} parent=11 // pred_check
          %p166 = pneg %p80
        $region18: #{shallow_nn_forward.1} parent=11 // pred_check_branch
          %168 = sbr.rel (%p166) target = $region20
        $region19: #{shallow_nn_forward.1} parent=11 // pred_region
          _
        $region20: #{shallow_nn_forward.1} parent=11 // pred_fallthru
          _
        // Predicated region
        $region21: #{shallow_nn_forward.1} parent=11 // pred_check
          %p169 = pneg %p101
        $region22: #{shallow_nn_forward.1} parent=11 // pred_check_branch
          %171 = sbr.rel (%p169) target = $region24
        $region23: #{shallow_nn_forward.1} parent=11 // pred_region
          _
        $region24: #{shallow_nn_forward.1} parent=11 // pred_fallthru
          _
        // Predicated region
        $region25: #{shallow_nn_forward.1} parent=11 // pred_check
          %p172 = pneg %p122
        $region26: #{shallow_nn_forward.1} parent=11 // pred_check_branch
          %174 = sbr.rel (%p172) target = $region28
        $region27: #{shallow_nn_forward.1} parent=11 // pred_region
          _
        $region28: #{shallow_nn_forward.1} parent=11 // pred_fallthru
          _
      $region12: #{shallow_nn_forward.1} parent=5 // pred_fallthru
        _
      %p175 = scmp.lt.s32.totalorder %s12, 4
      // Predicated region
      $region29: #{shallow_nn_forward.1} parent=5 // pred_check
        %p176 = pneg %p175
      $region30: #{shallow_nn_forward.1} parent=5 // pred_check_branch
        %178 = sbr.rel (%p176) target = $region32
      $region31: #{shallow_nn_forward.1} parent=5 // pred_region
        // Predicated region
        $region33: #{shallow_nn_forward.1} parent=31 // pred_check
          %p179 = pneg %p32
        $region34: #{shallow_nn_forward.1} parent=31 // pred_check_branch
          %181 = sbr.rel (%p179) target = $region36
        $region35: #{shallow_nn_forward.1} parent=31 // pred_region
          %s182 = smul.u32 32, %s12
          %s183 = ssub.s32 125, %s182
          %p184 = scmp.lt.s32.totalorder %s183, 32
          %s185 = scalar_select %p184, %s183, 32
          %s186 = smul.u32 8, %s185
          %p187 = scmp.lt.s32.totalorder %s182, 124
          %s188 = scalar_select %p187, %s182, 124
          %s189 = smul.addr %s188, 8
          %s190 = scalar_lea.vmem %s0, %s189
          %s191 = smul.u32 32, %s12
          %s192 = ssub.s32 125, %s191
          %p193 = scmp.lt.s32.totalorder %s192, 32
          %s194 = scalar_select %p193, %s192, 32
          %s195 = smul.u32 8, %s194
        $region36: #{shallow_nn_forward.1} parent=31 // pred_fallthru
          _
      $region32: #{shallow_nn_forward.1} parent=5 // pred_fallthru
        _
      %p196 = scmp.le.s32.totalorder 1, %s12
      %p197 = scmp.lt.s32.totalorder %s12, 5
      %p198 = pnand %p196, %p197
      %p199 = pneg %p198
      // Predicated region
      $region37: #{shallow_nn_forward.1} parent=5 // pred_check
        _
      $region38: #{shallow_nn_forward.1} parent=5 // pred_check_branch
        %201 = sbr.rel (%p198) target = $region40
      $region39: #{shallow_nn_forward.1} parent=5 // pred_region
        %s202 = ssub.s32 %s12, 1
        %s203 = smul.u32 32, %s17
        %s204 = ssub.s32 125, %s203
        %p205 = scmp.lt.s32.totalorder %s204, 32
        %s206 = scalar_select %p205, %s204, 32
        %s207 = smul.u32 8, %s206
        %p208 = scmp.lt.s32.totalorder %s203, 124
        %s209 = scalar_select %p208, %s203, 124
        %s210 = smul.addr %s209, 8
        %s211 = scalar_lea.vmem %s0, %s210
        %p212 = pneg %p38
        %p213 = pneg %p35
        %p214 = pneg %p59
        %p215 = pneg %p56
        %p216 = pneg %p80
        %p217 = pneg %p77
        %p218 = pneg %p101
        %p219 = pneg %p98
        %p220 = pneg %p122
        %p221 = pneg %p119
        %p222 = pneg %p148
        %p223 = pneg %p145
        %s224 = sand.u32 %s135, 1
        %s225 = sand.u32 %s135, 1
        %s226 = smul.addr %s225, 256
        %s227 = scalar_lea.vmem [#allocation3], %s226
        %s228 = smul.u32 32, %s17
        %s229 = ssub.s32 125, %s228
        %p230 = scmp.lt.s32.totalorder %s229, 32
        %s231 = scalar_select %p230, %s229, 32
        %s232 = smul.u32 8, %s231
        %p233 = scmp.lt.s32.totalorder %s228, 124
        %s234 = scalar_select %p233, %s228, 124
        %s235 = smul.addr %s234, 8
        %s236 = scalar_lea.vmem %s0, %s235
        %s237 = smul.u32 32, %s17
        %s238 = ssub.s32 125, %s237
        %p239 = scmp.lt.s32.totalorder %s238, 32
        %s240 = scalar_select %p239, %s238, 32
        %s241 = smul.u32 8, %s240
        %s242 = smul.u32 32, %s17
        %s243 = ssub.s32 125, %s242
        %p244 = scmp.lt.s32.totalorder %s243, 32
        %s245 = scalar_select %p244, %s243, 32
        %s246 = smul.u32 8, %s245
        %v248 = vld [vmem:[%s236] sm:$0xff]
        %v249 = vld [vmem:[%s236 + $0x8] sm:$0xff]
        %v250 = vld [vmem:[%s236 + $0x10] sm:$0xff]
        %v251 = vld [vmem:[%s236 + $0x18] sm:$0xff]
        %v252 = vld [vmem:[%s236 + $0x20] sm:$0xff]
        %v253 = vld [vmem:[%s236 + $0x28] sm:$0xff]
        %v254 = vld [vmem:[%s236 + $0x30] sm:$0xff]
        %v255 = vld [vmem:[%s236 + $0x38] sm:$0xff]
        %v256 = vld [vmem:[%s236 + $0x40] sm:$0xff]
        %v257 = vld [vmem:[%s236 + $0x48] sm:$0xff]
        %v258 = vld [vmem:[%s236 + $0x50] sm:$0xff]
        %v259 = vld [vmem:[%s236 + $0x58] sm:$0xff]
        %v260 = vld [vmem:[%s236 + $0x60] sm:$0xff]
        %v261 = vld [vmem:[%s236 + $0x68] sm:$0xff]
        %v262 = vld [vmem:[%s236 + $0x70] sm:$0xff]
        %v263 = vld [vmem:[%s236 + $0x78] sm:$0xff]
        %v264 = vld [vmem:[%s236 + $0x80] sm:$0xff]
        %v265 = vld [vmem:[%s236 + $0x88] sm:$0xff]
        %v266 = vld [vmem:[%s236 + $0x90] sm:$0xff]
        %v267 = vld [vmem:[%s236 + $0x98] sm:$0xff]
        %v268 = vld [vmem:[%s236 + $0xa0] sm:$0xff]
        %v269 = vld [vmem:[%s236 + $0xa8] sm:$0xff]
        %v270 = vld [vmem:[%s236 + $0xb0] sm:$0xff]
        %v271 = vld [vmem:[%s236 + $0xb8] sm:$0xff]
        %v272 = vld [vmem:[%s236 + $0xc0] sm:$0xff]
        %v273 = vld [vmem:[%s236 + $0xc8] sm:$0xff]
        %v274 = vld [vmem:[%s236 + $0xd0] sm:$0xff]
        %v275 = vld [vmem:[%s236 + $0xd8] sm:$0xff]
        %v276 = vld [vmem:[%s236 + $0xe0] sm:$0xff]
        %v277 = vld [vmem:[%s236 + $0xe8] sm:$0xff]
        %v278 = vld [vmem:[%s236 + $0xf0] sm:$0xff]
        %v279 = vld [vmem:[%s236 + $0xf8] sm:$0xff]
        %v280 = vpack.c.bf16 %v249, %v248
        %v281 = vpack.c.bf16 %v251, %v250
        %v282 = vpack.c.bf16 %v253, %v252
        %v283 = vpack.c.bf16 %v255, %v254
        %v284 = vpack.c.bf16 %v257, %v256
        %v285 = vpack.c.bf16 %v259, %v258
        %v286 = vpack.c.bf16 %v261, %v260
        %v287 = vpack.c.bf16 %v263, %v262
        %v288 = vpack.c.bf16 %v265, %v264
        %v289 = vpack.c.bf16 %v267, %v266
        %v290 = vpack.c.bf16 %v269, %v268
        %v291 = vpack.c.bf16 %v271, %v270
        %v292 = vpack.c.bf16 %v273, %v272
        %v293 = vpack.c.bf16 %v275, %v274
        %v294 = vpack.c.bf16 %v277, %v276
        %v295 = vpack.c.bf16 %v279, %v278
        %v296 = vld [vmem:[%s1] sm:$0xf]
        %v297 = vld [vmem:[%s1 + $0x4] sm:$0xf]
        %v298 = vld [vmem:[%s2] sm:$0x1]
        %v300 = vperm.slane %v298, 0
        %v304 = vunpack.c.l.b16 %v296
        %v305 = vunpack.c.l.b16 %v297
        %v306 = vpack.c.b16 %v305, %v304
        %vm308 = vcmask 130048
        %v310 = vsel %vm308, %v280, 0
        %v313 = vsel %vm308, %v281, 0
        %v316 = vsel %vm308, %v282, 0
        %v319 = vsel %vm308, %v283, 0
        %v322 = vsel %vm308, %v284, 0
        %v325 = vsel %vm308, %v285, 0
        %v328 = vsel %vm308, %v286, 0
        %v331 = vsel %vm308, %v287, 0
        %v334 = vsel %vm308, %v288, 0
        %v337 = vsel %vm308, %v289, 0
        %v340 = vsel %vm308, %v290, 0
        %v343 = vsel %vm308, %v291, 0
        %v346 = vsel %vm308, %v292, 0
        %v349 = vsel %vm308, %v293, 0
        %v352 = vsel %vm308, %v294, 0
        %v355 = vsel %vm308, %v295, 0
        %357 = vmatpush.bf16.msra.mxu0 0
        %358 = vmatpush.bf16.msra.mxu0 0
        %359 = vmatpush.bf16.msra.mxu0 0
        %360 = vmatpush.bf16.msra.mxu0 0
        %361 = vmatpush.bf16.msra.mxu0 0
        %362 = vmatpush.bf16.msra.mxu0 0
        %363 = vmatpush.bf16.msra.mxu0 0
        %364 = vmatpush.bf16.msra.mxu0 %v306
        %365 = vmatmul.bf16.gmra.mxu0 %v310
        %v366 = vpop.f32.mrf.mxu0
        %v367 = vadd.f32 %v300, %v366
        %v368 = vpop.f32.mrf.mxu0
        %v369 = vadd.f32 %v300, %v368
        %370 = vmatmul.bf16.gmra.mxu0 %v313
        %v371 = vpop.f32.mrf.mxu0
        %v372 = vadd.f32 %v300, %v371
        %v373 = vpop.f32.mrf.mxu0
        %v374 = vadd.f32 %v300, %v373
        %375 = vmatmul.bf16.gmra.mxu0 %v316
        %v376 = vpop.f32.mrf.mxu0
        %v377 = vadd.f32 %v300, %v376
        %v378 = vpop.f32.mrf.mxu0
        %v379 = vadd.f32 %v300, %v378
        %380 = vmatmul.bf16.gmra.mxu0 %v319
        %v381 = vpop.f32.mrf.mxu0
        %v382 = vadd.f32 %v300, %v381
        %v383 = vpop.f32.mrf.mxu0
        %v384 = vadd.f32 %v300, %v383
        %385 = vmatmul.bf16.gmra.mxu0 %v322
        %v386 = vpop.f32.mrf.mxu0
        %v387 = vadd.f32 %v300, %v386
        %v388 = vpop.f32.mrf.mxu0
        %v389 = vadd.f32 %v300, %v388
        %390 = vmatmul.bf16.gmra.mxu0 %v325
        %v391 = vpop.f32.mrf.mxu0
        %v392 = vadd.f32 %v300, %v391
        %v393 = vpop.f32.mrf.mxu0
        %v394 = vadd.f32 %v300, %v393
        %395 = vmatmul.bf16.gmra.mxu0 %v328
        %v396 = vpop.f32.mrf.mxu0
        %v397 = vadd.f32 %v300, %v396
        %v398 = vpop.f32.mrf.mxu0
        %v399 = vadd.f32 %v300, %v398
        %400 = vmatmul.bf16.gmra.mxu0 %v331
        %v401 = vpop.f32.mrf.mxu0
        %v402 = vadd.f32 %v300, %v401
        %v403 = vpop.f32.mrf.mxu0
        %v404 = vadd.f32 %v300, %v403
        %405 = vmatmul.bf16.gmra.mxu0 %v334
        %v406 = vpop.f32.mrf.mxu0
        %v407 = vadd.f32 %v300, %v406
        %v408 = vpop.f32.mrf.mxu0
        %v409 = vadd.f32 %v300, %v408
        %410 = vmatmul.bf16.gmra.mxu0 %v337
        %v411 = vpop.f32.mrf.mxu0
        %v412 = vadd.f32 %v300, %v411
        %v413 = vpop.f32.mrf.mxu0
        %v414 = vadd.f32 %v300, %v413
        %415 = vmatmul.bf16.gmra.mxu0 %v340
        %v416 = vpop.f32.mrf.mxu0
        %v417 = vadd.f32 %v300, %v416
        %v418 = vpop.f32.mrf.mxu0
        %v419 = vadd.f32 %v300, %v418
        %420 = vmatmul.bf16.gmra.mxu0 %v343
        %v421 = vpop.f32.mrf.mxu0
        %v422 = vadd.f32 %v300, %v421
        %v423 = vpop.f32.mrf.mxu0
        %v424 = vadd.f32 %v300, %v423
        %425 = vmatmul.bf16.gmra.mxu0 %v346
        %v426 = vpop.f32.mrf.mxu0
        %v427 = vadd.f32 %v300, %v426
        %v428 = vpop.f32.mrf.mxu0
        %v429 = vadd.f32 %v300, %v428
        %430 = vmatmul.bf16.gmra.mxu0 %v349
        %v431 = vpop.f32.mrf.mxu0
        %v432 = vadd.f32 %v300, %v431
        %v433 = vpop.f32.mrf.mxu0
        %v434 = vadd.f32 %v300, %v433
        %435 = vmatmul.bf16.gmra.mxu0 %v352
        %v436 = vpop.f32.mrf.mxu0
        %v437 = vadd.f32 %v300, %v436
        %v438 = vpop.f32.mrf.mxu0
        %v439 = vadd.f32 %v300, %v438
        %440 = vmatmul.bf16.gmra.mxu0 %v355
        %v441 = vpop.f32.mrf.mxu0
        %v442 = vadd.f32 %v300, %v441
        %v443 = vpop.f32.mrf.mxu0
        %v444 = vadd.f32 %v300, %v443
        %445 = vdwg.mxu0
        %v446 = vmax.f32 %v367, 0.0
        %v447 = vmax.f32 %v369, 0.0
        %v448 = vmax.f32 %v372, 0.0
        %v449 = vmax.f32 %v374, 0.0
        %v450 = vmax.f32 %v377, 0.0
        %v451 = vmax.f32 %v379, 0.0
        %v452 = vmax.f32 %v382, 0.0
        %v453 = vmax.f32 %v384, 0.0
        %v454 = vmax.f32 %v387, 0.0
        %v455 = vmax.f32 %v389, 0.0
        %v456 = vmax.f32 %v392, 0.0
        %v457 = vmax.f32 %v394, 0.0
        %v458 = vmax.f32 %v397, 0.0
        %v459 = vmax.f32 %v399, 0.0
        %v460 = vmax.f32 %v402, 0.0
        %v461 = vmax.f32 %v404, 0.0
        %v462 = vmax.f32 %v407, 0.0
        %v463 = vmax.f32 %v409, 0.0
        %v464 = vmax.f32 %v412, 0.0
        %v465 = vmax.f32 %v414, 0.0
        %v466 = vmax.f32 %v417, 0.0
        %v467 = vmax.f32 %v419, 0.0
        %v468 = vmax.f32 %v422, 0.0
        %v469 = vmax.f32 %v424, 0.0
        %v470 = vmax.f32 %v427, 0.0
        %v471 = vmax.f32 %v429, 0.0
        %v472 = vmax.f32 %v432, 0.0
        %v473 = vmax.f32 %v434, 0.0
        %v474 = vmax.f32 %v437, 0.0
        %v475 = vmax.f32 %v439, 0.0
        %v476 = vmax.f32 %v442, 0.0
        %v477 = vmax.f32 %v444, 0.0
        %v478 = vld [vmem:[%s3] sm:$0x1]
        %v480 = vperm.slane %v478, 0
        %v482 = vmul.f32 %v446, %v480
        %v483 = vmul.f32 %v447, %v480
        %v484 = vmul.f32 %v448, %v480
        %v485 = vmul.f32 %v449, %v480
        %v486 = vmul.f32 %v450, %v480
        %v487 = vmul.f32 %v451, %v480
        %v488 = vmul.f32 %v452, %v480
        %v489 = vmul.f32 %v453, %v480
        %v490 = vmul.f32 %v454, %v480
        %v491 = vmul.f32 %v455, %v480
        %v492 = vmul.f32 %v456, %v480
        %v493 = vmul.f32 %v457, %v480
        %v494 = vmul.f32 %v458, %v480
        %v495 = vmul.f32 %v459, %v480
        %v496 = vmul.f32 %v460, %v480
        %v497 = vmul.f32 %v461, %v480
        %v498 = vmul.f32 %v462, %v480
        %v499 = vmul.f32 %v463, %v480
        %v500 = vmul.f32 %v464, %v480
        %v501 = vmul.f32 %v465, %v480
        %v502 = vmul.f32 %v466, %v480
        %v503 = vmul.f32 %v467, %v480
        %v504 = vmul.f32 %v468, %v480
        %v505 = vmul.f32 %v469, %v480
        %v506 = vmul.f32 %v470, %v480
        %v507 = vmul.f32 %v471, %v480
        %v508 = vmul.f32 %v472, %v480
        %v509 = vmul.f32 %v473, %v480
        %v510 = vmul.f32 %v474, %v480
        %v511 = vmul.f32 %v475, %v480
        %v512 = vmul.f32 %v476, %v480
        %v513 = vmul.f32 %v477, %v480
        %vm514 = vcmask 64512
        %v515 = vsel %vm514, %v482, 0.0
        %516 = vadd.xlane.f32.xlu0 %v515
        %v517 = vpop.xlane.xlu0 %516
        %v518 = vsel %vm514, %v483, 0.0
        %519 = vadd.xlane.f32.xlu0 %v518
        %v520 = vpop.xlane.xlu0 %519
        %v521 = vsel %vm514, %v484, 0.0
        %522 = vadd.xlane.f32.xlu0 %v521
        %v523 = vpop.xlane.xlu0 %522
        %v524 = vsel %vm514, %v485, 0.0
        %525 = vadd.xlane.f32.xlu0 %v524
        %v526 = vpop.xlane.xlu0 %525
        %v527 = vsel %vm514, %v486, 0.0
        %528 = vadd.xlane.f32.xlu0 %v527
        %v529 = vpop.xlane.xlu0 %528
        %v530 = vsel %vm514, %v487, 0.0
        %531 = vadd.xlane.f32.xlu0 %v530
        %v532 = vpop.xlane.xlu0 %531
        %v533 = vsel %vm514, %v488, 0.0
        %534 = vadd.xlane.f32.xlu0 %v533
        %v535 = vpop.xlane.xlu0 %534
        %v536 = vsel %vm514, %v489, 0.0
        %537 = vadd.xlane.f32.xlu0 %v536
        %v538 = vpop.xlane.xlu0 %537
        %v539 = vsel %vm514, %v490, 0.0
        %540 = vadd.xlane.f32.xlu0 %v539
        %v541 = vpop.xlane.xlu0 %540
        %v542 = vsel %vm514, %v491, 0.0
        %543 = vadd.xlane.f32.xlu0 %v542
        %v544 = vpop.xlane.xlu0 %543
        %v545 = vsel %vm514, %v492, 0.0
        %546 = vadd.xlane.f32.xlu0 %v545
        %v547 = vpop.xlane.xlu0 %546
        %v548 = vsel %vm514, %v493, 0.0
        %549 = vadd.xlane.f32.xlu0 %v548
        %v550 = vpop.xlane.xlu0 %549
        %v551 = vsel %vm514, %v494, 0.0
        %552 = vadd.xlane.f32.xlu0 %v551
        %v553 = vpop.xlane.xlu0 %552
        %v554 = vsel %vm514, %v495, 0.0
        %555 = vadd.xlane.f32.xlu0 %v554
        %v556 = vpop.xlane.xlu0 %555
        %v557 = vsel %vm514, %v496, 0.0
        %558 = vadd.xlane.f32.xlu0 %v557
        %v559 = vpop.xlane.xlu0 %558
        %v560 = vsel %vm514, %v497, 0.0
        %561 = vadd.xlane.f32.xlu0 %v560
        %v562 = vpop.xlane.xlu0 %561
        %v563 = vsel %vm514, %v498, 0.0
        %564 = vadd.xlane.f32.xlu0 %v563
        %v565 = vpop.xlane.xlu0 %564
        %v566 = vsel %vm514, %v499, 0.0
        %567 = vadd.xlane.f32.xlu0 %v566
        %v568 = vpop.xlane.xlu0 %567
        %v569 = vsel %vm514, %v500, 0.0
        %570 = vadd.xlane.f32.xlu0 %v569
        %v571 = vpop.xlane.xlu0 %570
        %v572 = vsel %vm514, %v501, 0.0
        %573 = vadd.xlane.f32.xlu0 %v572
        %v574 = vpop.xlane.xlu0 %573
        %v575 = vsel %vm514, %v502, 0.0
        %576 = vadd.xlane.f32.xlu0 %v575
        %v577 = vpop.xlane.xlu0 %576
        %v578 = vsel %vm514, %v503, 0.0
        %579 = vadd.xlane.f32.xlu0 %v578
        %v580 = vpop.xlane.xlu0 %579
        %v581 = vsel %vm514, %v504, 0.0
        %582 = vadd.xlane.f32.xlu0 %v581
        %v583 = vpop.xlane.xlu0 %582
        %v584 = vsel %vm514, %v505, 0.0
        %585 = vadd.xlane.f32.xlu0 %v584
        %v586 = vpop.xlane.xlu0 %585
        %v587 = vsel %vm514, %v506, 0.0
        %588 = vadd.xlane.f32.xlu0 %v587
        %v589 = vpop.xlane.xlu0 %588
        %v590 = vsel %vm514, %v507, 0.0
        %591 = vadd.xlane.f32.xlu0 %v590
        %v592 = vpop.xlane.xlu0 %591
        %v593 = vsel %vm514, %v508, 0.0
        %594 = vadd.xlane.f32.xlu0 %v593
        %v595 = vpop.xlane.xlu0 %594
        %v596 = vsel %vm514, %v509, 0.0
        %597 = vadd.xlane.f32.xlu0 %v596
        %v598 = vpop.xlane.xlu0 %597
        %v599 = vsel %vm514, %v510, 0.0
        %600 = vadd.xlane.f32.xlu0 %v599
        %v601 = vpop.xlane.xlu0 %600
        %v602 = vsel %vm514, %v511, 0.0
        %603 = vadd.xlane.f32.xlu0 %v602
        %v604 = vpop.xlane.xlu0 %603
        %v605 = vsel %vm514, %v512, 0.0
        %606 = vadd.xlane.f32.xlu0 %v605
        %v607 = vpop.xlane.xlu0 %606
        %v608 = vsel %vm514, %v513, 0.0
        %609 = vadd.xlane.f32.xlu0 %v608
        %v610 = vpop.xlane.xlu0 %609
        %s611 = sld [smem:[#allocation2]]
        %v612 = vstv %s611
        %v613 = vadd.f32 %v517, %v612
        %v614 = vadd.f32 %v520, %v612
        %v615 = vadd.f32 %v523, %v612
        %v616 = vadd.f32 %v526, %v612
        %v617 = vadd.f32 %v529, %v612
        %v618 = vadd.f32 %v532, %v612
        %v619 = vadd.f32 %v535, %v612
        %v620 = vadd.f32 %v538, %v612
        %v621 = vadd.f32 %v541, %v612
        %v622 = vadd.f32 %v544, %v612
        %v623 = vadd.f32 %v547, %v612
        %v624 = vadd.f32 %v550, %v612
        %v625 = vadd.f32 %v553, %v612
        %v626 = vadd.f32 %v556, %v612
        %v627 = vadd.f32 %v559, %v612
        %v628 = vadd.f32 %v562, %v612
        %v629 = vadd.f32 %v565, %v612
        %v630 = vadd.f32 %v568, %v612
        %v631 = vadd.f32 %v571, %v612
        %v632 = vadd.f32 %v574, %v612
        %v633 = vadd.f32 %v577, %v612
        %v634 = vadd.f32 %v580, %v612
        %v635 = vadd.f32 %v583, %v612
        %v636 = vadd.f32 %v586, %v612
        %v637 = vadd.f32 %v589, %v612
        %v638 = vadd.f32 %v592, %v612
        %v639 = vadd.f32 %v595, %v612
        %v640 = vadd.f32 %v598, %v612
        %v641 = vadd.f32 %v601, %v612
        %v642 = vadd.f32 %v604, %v612
        %v643 = vadd.f32 %v607, %v612
        %v644 = vadd.f32 %v610, %v612
        %v645 = vxor.u32 %v613, 2147483648
        %v646 = vxor.u32 %v614, 2147483648
        %v647 = vxor.u32 %v615, 2147483648
        %v648 = vxor.u32 %v616, 2147483648
        %v649 = vxor.u32 %v617, 2147483648
        %v650 = vxor.u32 %v618, 2147483648
        %v651 = vxor.u32 %v619, 2147483648
        %v652 = vxor.u32 %v620, 2147483648
        %v653 = vxor.u32 %v621, 2147483648
        %v654 = vxor.u32 %v622, 2147483648
        %v655 = vxor.u32 %v623, 2147483648
        %v656 = vxor.u32 %v624, 2147483648
        %v657 = vxor.u32 %v625, 2147483648
        %v658 = vxor.u32 %v626, 2147483648
        %v659 = vxor.u32 %v627, 2147483648
        %v660 = vxor.u32 %v628, 2147483648
        %v661 = vxor.u32 %v629, 2147483648
        %v662 = vxor.u32 %v630, 2147483648
        %v663 = vxor.u32 %v631, 2147483648
        %v664 = vxor.u32 %v632, 2147483648
        %v665 = vxor.u32 %v633, 2147483648
        %v666 = vxor.u32 %v634, 2147483648
        %v667 = vxor.u32 %v635, 2147483648
        %v668 = vxor.u32 %v636, 2147483648
        %v669 = vxor.u32 %v637, 2147483648
        %v670 = vxor.u32 %v638, 2147483648
        %v671 = vxor.u32 %v639, 2147483648
        %v672 = vxor.u32 %v640, 2147483648
        %v673 = vxor.u32 %v641, 2147483648
        %v674 = vxor.u32 %v642, 2147483648
        %v675 = vxor.u32 %v643, 2147483648
        %v676 = vxor.u32 %v644, 2147483648
        %v677 = vmul.f32 %v645, 1.442695
        %v678 = vpow.pop %v677
        %v679 = vmul.f32 %v646, 1.442695
        %v680 = vpow.pop %v679
        %v681 = vmul.f32 %v647, 1.442695
        %v682 = vpow.pop %v681
        %v683 = vmul.f32 %v648, 1.442695
        %v684 = vpow.pop %v683
        %v685 = vmul.f32 %v649, 1.442695
        %v686 = vpow.pop %v685
        %v687 = vmul.f32 %v650, 1.442695
        %v688 = vpow.pop %v687
        %v689 = vmul.f32 %v651, 1.442695
        %v690 = vpow.pop %v689
        %v691 = vmul.f32 %v652, 1.442695
        %v692 = vpow.pop %v691
        %v693 = vmul.f32 %v653, 1.442695
        %v694 = vpow.pop %v693
        %v695 = vmul.f32 %v654, 1.442695
        %v696 = vpow.pop %v695
        %v697 = vmul.f32 %v655, 1.442695
        %v698 = vpow.pop %v697
        %v699 = vmul.f32 %v656, 1.442695
        %v700 = vpow.pop %v699
        %v701 = vmul.f32 %v657, 1.442695
        %v702 = vpow.pop %v701
        %v703 = vmul.f32 %v658, 1.442695
        %v704 = vpow.pop %v703
        %v705 = vmul.f32 %v659, 1.442695
        %v706 = vpow.pop %v705
        %v707 = vmul.f32 %v660, 1.442695
        %v708 = vpow.pop %v707
        %v709 = vmul.f32 %v661, 1.442695
        %v710 = vpow.pop %v709
        %v711 = vmul.f32 %v662, 1.442695
        %v712 = vpow.pop %v711
        %v713 = vmul.f32 %v663, 1.442695
        %v714 = vpow.pop %v713
        %v715 = vmul.f32 %v664, 1.442695
        %v716 = vpow.pop %v715
        %v717 = vmul.f32 %v665, 1.442695
        %v718 = vpow.pop %v717
        %v719 = vmul.f32 %v666, 1.442695
        %v720 = vpow.pop %v719
        %v721 = vmul.f32 %v667, 1.442695
        %v722 = vpow.pop %v721
        %v723 = vmul.f32 %v668, 1.442695
        %v724 = vpow.pop %v723
        %v725 = vmul.f32 %v669, 1.442695
        %v726 = vpow.pop %v725
        %v727 = vmul.f32 %v670, 1.442695
        %v728 = vpow.pop %v727
        %v729 = vmul.f32 %v671, 1.442695
        %v730 = vpow.pop %v729
        %v731 = vmul.f32 %v672, 1.442695
        %v732 = vpow.pop %v731
        %v733 = vmul.f32 %v673, 1.442695
        %v734 = vpow.pop %v733
        %v735 = vmul.f32 %v674, 1.442695
        %v736 = vpow.pop %v735
        %v737 = vmul.f32 %v675, 1.442695
        %v738 = vpow.pop %v737
        %v739 = vmul.f32 %v676, 1.442695
        %v740 = vpow.pop %v739
        %v741 = vadd.f32 %v678, 1.0
        %v742 = vadd.f32 %v680, 1.0
        %v743 = vadd.f32 %v682, 1.0
        %v744 = vadd.f32 %v684, 1.0
        %v745 = vadd.f32 %v686, 1.0
        %v746 = vadd.f32 %v688, 1.0
        %v747 = vadd.f32 %v690, 1.0
        %v748 = vadd.f32 %v692, 1.0
        %v749 = vadd.f32 %v694, 1.0
        %v750 = vadd.f32 %v696, 1.0
        %v751 = vadd.f32 %v698, 1.0
        %v752 = vadd.f32 %v700, 1.0
        %v753 = vadd.f32 %v702, 1.0
        %v754 = vadd.f32 %v704, 1.0
        %v755 = vadd.f32 %v706, 1.0
        %v756 = vadd.f32 %v708, 1.0
        %v757 = vadd.f32 %v710, 1.0
        %v758 = vadd.f32 %v712, 1.0
        %v759 = vadd.f32 %v714, 1.0
        %v760 = vadd.f32 %v716, 1.0
        %v761 = vadd.f32 %v718, 1.0
        %v762 = vadd.f32 %v720, 1.0
        %v763 = vadd.f32 %v722, 1.0
        %v764 = vadd.f32 %v724, 1.0
        %v765 = vadd.f32 %v726, 1.0
        %v766 = vadd.f32 %v728, 1.0
        %v767 = vadd.f32 %v730, 1.0
        %v768 = vadd.f32 %v732, 1.0
        %v769 = vadd.f32 %v734, 1.0
        %v770 = vadd.f32 %v736, 1.0
        %v771 = vadd.f32 %v738, 1.0
        %v772 = vadd.f32 %v740, 1.0
        %v773 = vrcp.pop %v741
        %v774 = vmul.f32 %v741, %v773
        %v775 = vsub.f32 1.0, %v774
        %v776 = vmul.f32 %v773, %v775
        %v777 = vadd.f32 %v773, %v776
        %vm778 = vweird.f32 %v741
        %vm779 = vweird.f32 %v773
        %vm780 = vmor %vm778, %vm779
        %v781 = vsel %vm780, %v773, %v777
        %v782 = vand.u32 2147483647, %v741
        %vm783 = vcmp.eq.f32.partialorder %v782, 8.507059e+37
        %v784 = vand.u32 %v741, 2147483648
        %v785 = vor.u32 1.1754944e-38, %v784
        %v786 = vsel %vm783, %v785, %v781
        %v787 = vmul.f32 1.0, %v786
        %v788 = vrcp.pop %v742
        %v789 = vmul.f32 %v742, %v788
        %v790 = vsub.f32 1.0, %v789
        %v791 = vmul.f32 %v788, %v790
        %v792 = vadd.f32 %v788, %v791
        %vm793 = vweird.f32 %v742
        %vm794 = vweird.f32 %v788
        %vm795 = vmor %vm793, %vm794
        %v796 = vsel %vm795, %v788, %v792
        %v797 = vand.u32 2147483647, %v742
        %vm798 = vcmp.eq.f32.partialorder %v797, 8.507059e+37
        %v799 = vand.u32 %v742, 2147483648
        %v800 = vor.u32 1.1754944e-38, %v799
        %v801 = vsel %vm798, %v800, %v796
        %v802 = vmul.f32 1.0, %v801
        %v803 = vrcp.pop %v743
        %v804 = vmul.f32 %v743, %v803
        %v805 = vsub.f32 1.0, %v804
        %v806 = vmul.f32 %v803, %v805
        %v807 = vadd.f32 %v803, %v806
        %vm808 = vweird.f32 %v743
        %vm809 = vweird.f32 %v803
        %vm810 = vmor %vm808, %vm809
        %v811 = vsel %vm810, %v803, %v807
        %v812 = vand.u32 2147483647, %v743
        %vm813 = vcmp.eq.f32.partialorder %v812, 8.507059e+37
        %v814 = vand.u32 %v743, 2147483648
        %v815 = vor.u32 1.1754944e-38, %v814
        %v816 = vsel %vm813, %v815, %v811
        %v817 = vmul.f32 1.0, %v816
        %v818 = vrcp.pop %v744
        %v819 = vmul.f32 %v744, %v818
        %v820 = vsub.f32 1.0, %v819
        %v821 = vmul.f32 %v818, %v820
        %v822 = vadd.f32 %v818, %v821
        %vm823 = vweird.f32 %v744
        %vm824 = vweird.f32 %v818
        %vm825 = vmor %vm823, %vm824
        %v826 = vsel %vm825, %v818, %v822
        %v827 = vand.u32 2147483647, %v744
        %vm828 = vcmp.eq.f32.partialorder %v827, 8.507059e+37
        %v829 = vand.u32 %v744, 2147483648
        %v830 = vor.u32 1.1754944e-38, %v829
        %v831 = vsel %vm828, %v830, %v826
        %v832 = vmul.f32 1.0, %v831
        %v833 = vrcp.pop %v745
        %v834 = vmul.f32 %v745, %v833
        %v835 = vsub.f32 1.0, %v834
        %v836 = vmul.f32 %v833, %v835
        %v837 = vadd.f32 %v833, %v836
        %vm838 = vweird.f32 %v745
        %vm839 = vweird.f32 %v833
        %vm840 = vmor %vm838, %vm839
        %v841 = vsel %vm840, %v833, %v837
        %v842 = vand.u32 2147483647, %v745
        %vm843 = vcmp.eq.f32.partialorder %v842, 8.507059e+37
        %v844 = vand.u32 %v745, 2147483648
        %v845 = vor.u32 1.1754944e-38, %v844
        %v846 = vsel %vm843, %v845, %v841
        %v847 = vmul.f32 1.0, %v846
        %v848 = vrcp.pop %v746
        %v849 = vmul.f32 %v746, %v848
        %v850 = vsub.f32 1.0, %v849
        %v851 = vmul.f32 %v848, %v850
        %v852 = vadd.f32 %v848, %v851
        %vm853 = vweird.f32 %v746
        %vm854 = vweird.f32 %v848
        %vm855 = vmor %vm853, %vm854
        %v856 = vsel %vm855, %v848, %v852
        %v857 = vand.u32 2147483647, %v746
        %vm858 = vcmp.eq.f32.partialorder %v857, 8.507059e+37
        %v859 = vand.u32 %v746, 2147483648
        %v860 = vor.u32 1.1754944e-38, %v859
        %v861 = vsel %vm858, %v860, %v856
        %v862 = vmul.f32 1.0, %v861
        %v863 = vrcp.pop %v747
        %v864 = vmul.f32 %v747, %v863
        %v865 = vsub.f32 1.0, %v864
        %v866 = vmul.f32 %v863, %v865
        %v867 = vadd.f32 %v863, %v866
        %vm868 = vweird.f32 %v747
        %vm869 = vweird.f32 %v863
        %vm870 = vmor %vm868, %vm869
        %v871 = vsel %vm870, %v863, %v867
        %v872 = vand.u32 2147483647, %v747
        %vm873 = vcmp.eq.f32.partialorder %v872, 8.507059e+37
        %v874 = vand.u32 %v747, 2147483648
        %v875 = vor.u32 1.1754944e-38, %v874
        %v876 = vsel %vm873, %v875, %v871
        %v877 = vmul.f32 1.0, %v876
        %v878 = vrcp.pop %v748
        %v879 = vmul.f32 %v748, %v878
        %v880 = vsub.f32 1.0, %v879
        %v881 = vmul.f32 %v878, %v880
        %v882 = vadd.f32 %v878, %v881
        %vm883 = vweird.f32 %v748
        %vm884 = vweird.f32 %v878
        %vm885 = vmor %vm883, %vm884
        %v886 = vsel %vm885, %v878, %v882
        %v887 = vand.u32 2147483647, %v748
        %vm888 = vcmp.eq.f32.partialorder %v887, 8.507059e+37
        %v889 = vand.u32 %v748, 2147483648
        %v890 = vor.u32 1.1754944e-38, %v889
        %v891 = vsel %vm888, %v890, %v886
        %v892 = vmul.f32 1.0, %v891
        %v893 = vrcp.pop %v749
        %v894 = vmul.f32 %v749, %v893
        %v895 = vsub.f32 1.0, %v894
        %v896 = vmul.f32 %v893, %v895
        %v897 = vadd.f32 %v893, %v896
        %vm898 = vweird.f32 %v749
        %vm899 = vweird.f32 %v893
        %vm900 = vmor %vm898, %vm899
        %v901 = vsel %vm900, %v893, %v897
        %v902 = vand.u32 2147483647, %v749
        %vm903 = vcmp.eq.f32.partialorder %v902, 8.507059e+37
        %v904 = vand.u32 %v749, 2147483648
        %v905 = vor.u32 1.1754944e-38, %v904
        %v906 = vsel %vm903, %v905, %v901
        %v907 = vmul.f32 1.0, %v906
        %v908 = vrcp.pop %v750
        %v909 = vmul.f32 %v750, %v908
        %v910 = vsub.f32 1.0, %v909
        %v911 = vmul.f32 %v908, %v910
        %v912 = vadd.f32 %v908, %v911
        %vm913 = vweird.f32 %v750
        %vm914 = vweird.f32 %v908
        %vm915 = vmor %vm913, %vm914
        %v916 = vsel %vm915, %v908, %v912
        %v917 = vand.u32 2147483647, %v750
        %vm918 = vcmp.eq.f32.partialorder %v917, 8.507059e+37
        %v919 = vand.u32 %v750, 2147483648
        %v920 = vor.u32 1.1754944e-38, %v919
        %v921 = vsel %vm918, %v920, %v916
        %v922 = vmul.f32 1.0, %v921
        %v923 = vrcp.pop %v751
        %v924 = vmul.f32 %v751, %v923
        %v925 = vsub.f32 1.0, %v924
        %v926 = vmul.f32 %v923, %v925
        %v927 = vadd.f32 %v923, %v926
        %vm928 = vweird.f32 %v751
        %vm929 = vweird.f32 %v923
        %vm930 = vmor %vm928, %vm929
        %v931 = vsel %vm930, %v923, %v927
        %v932 = vand.u32 2147483647, %v751
        %vm933 = vcmp.eq.f32.partialorder %v932, 8.507059e+37
        %v934 = vand.u32 %v751, 2147483648
        %v935 = vor.u32 1.1754944e-38, %v934
        %v936 = vsel %vm933, %v935, %v931
        %v937 = vmul.f32 1.0, %v936
        %v938 = vrcp.pop %v752
        %v939 = vmul.f32 %v752, %v938
        %v940 = vsub.f32 1.0, %v939
        %v941 = vmul.f32 %v938, %v940
        %v942 = vadd.f32 %v938, %v941
        %vm943 = vweird.f32 %v752
        %vm944 = vweird.f32 %v938
        %vm945 = vmor %vm943, %vm944
        %v946 = vsel %vm945, %v938, %v942
        %v947 = vand.u32 2147483647, %v752
        %vm948 = vcmp.eq.f32.partialorder %v947, 8.507059e+37
        %v949 = vand.u32 %v752, 2147483648
        %v950 = vor.u32 1.1754944e-38, %v949
        %v951 = vsel %vm948, %v950, %v946
        %v952 = vmul.f32 1.0, %v951
        %v953 = vrcp.pop %v753
        %v954 = vmul.f32 %v753, %v953
        %v955 = vsub.f32 1.0, %v954
        %v956 = vmul.f32 %v953, %v955
        %v957 = vadd.f32 %v953, %v956
        %vm958 = vweird.f32 %v753
        %vm959 = vweird.f32 %v953
        %vm960 = vmor %vm958, %vm959
        %v961 = vsel %vm960, %v953, %v957
        %v962 = vand.u32 2147483647, %v753
        %vm963 = vcmp.eq.f32.partialorder %v962, 8.507059e+37
        %v964 = vand.u32 %v753, 2147483648
        %v965 = vor.u32 1.1754944e-38, %v964
        %v966 = vsel %vm963, %v965, %v961
        %v967 = vmul.f32 1.0, %v966
        %v968 = vrcp.pop %v754
        %v969 = vmul.f32 %v754, %v968
        %v970 = vsub.f32 1.0, %v969
        %v971 = vmul.f32 %v968, %v970
        %v972 = vadd.f32 %v968, %v971
        %vm973 = vweird.f32 %v754
        %vm974 = vweird.f32 %v968
        %vm975 = vmor %vm973, %vm974
        %v976 = vsel %vm975, %v968, %v972
        %v977 = vand.u32 2147483647, %v754
        %vm978 = vcmp.eq.f32.partialorder %v977, 8.507059e+37
        %v979 = vand.u32 %v754, 2147483648
        %v980 = vor.u32 1.1754944e-38, %v979
        %v981 = vsel %vm978, %v980, %v976
        %v982 = vmul.f32 1.0, %v981
        %v983 = vrcp.pop %v755
        %v984 = vmul.f32 %v755, %v983
        %v985 = vsub.f32 1.0, %v984
        %v986 = vmul.f32 %v983, %v985
        %v987 = vadd.f32 %v983, %v986
        %vm988 = vweird.f32 %v755
        %vm989 = vweird.f32 %v983
        %vm990 = vmor %vm988, %vm989
        %v991 = vsel %vm990, %v983, %v987
        %v992 = vand.u32 2147483647, %v755
        %vm993 = vcmp.eq.f32.partialorder %v992, 8.507059e+37
        %v994 = vand.u32 %v755, 2147483648
        %v995 = vor.u32 1.1754944e-38, %v994
        %v996 = vsel %vm993, %v995, %v991
        %v997 = vmul.f32 1.0, %v996
        %v998 = vrcp.pop %v756
        %v999 = vmul.f32 %v756, %v998
        %v1000 = vsub.f32 1.0, %v999
        %v1001 = vmul.f32 %v998, %v1000
        %v1002 = vadd.f32 %v998, %v1001
        %vm1003 = vweird.f32 %v756
        %vm1004 = vweird.f32 %v998
        %vm1005 = vmor %vm1003, %vm1004
        %v1006 = vsel %vm1005, %v998, %v1002
        %v1007 = vand.u32 2147483647, %v756
        %vm1008 = vcmp.eq.f32.partialorder %v1007, 8.507059e+37
        %v1009 = vand.u32 %v756, 2147483648
        %v1010 = vor.u32 1.1754944e-38, %v1009
        %v1011 = vsel %vm1008, %v1010, %v1006
        %v1012 = vmul.f32 1.0, %v1011
        %v1013 = vrcp.pop %v757
        %v1014 = vmul.f32 %v757, %v1013
        %v1015 = vsub.f32 1.0, %v1014
        %v1016 = vmul.f32 %v1013, %v1015
        %v1017 = vadd.f32 %v1013, %v1016
        %vm1018 = vweird.f32 %v757
        %vm1019 = vweird.f32 %v1013
        %vm1020 = vmor %vm1018, %vm1019
        %v1021 = vsel %vm1020, %v1013, %v1017
        %v1022 = vand.u32 2147483647, %v757
        %vm1023 = vcmp.eq.f32.partialorder %v1022, 8.507059e+37
        %v1024 = vand.u32 %v757, 2147483648
        %v1025 = vor.u32 1.1754944e-38, %v1024
        %v1026 = vsel %vm1023, %v1025, %v1021
        %v1027 = vmul.f32 1.0, %v1026
        %v1028 = vrcp.pop %v758
        %v1029 = vmul.f32 %v758, %v1028
        %v1030 = vsub.f32 1.0, %v1029
        %v1031 = vmul.f32 %v1028, %v1030
        %v1032 = vadd.f32 %v1028, %v1031
        %vm1033 = vweird.f32 %v758
        %vm1034 = vweird.f32 %v1028
        %vm1035 = vmor %vm1033, %vm1034
        %v1036 = vsel %vm1035, %v1028, %v1032
        %v1037 = vand.u32 2147483647, %v758
        %vm1038 = vcmp.eq.f32.partialorder %v1037, 8.507059e+37
        %v1039 = vand.u32 %v758, 2147483648
        %v1040 = vor.u32 1.1754944e-38, %v1039
        %v1041 = vsel %vm1038, %v1040, %v1036
        %v1042 = vmul.f32 1.0, %v1041
        %v1043 = vrcp.pop %v759
        %v1044 = vmul.f32 %v759, %v1043
        %v1045 = vsub.f32 1.0, %v1044
        %v1046 = vmul.f32 %v1043, %v1045
        %v1047 = vadd.f32 %v1043, %v1046
        %vm1048 = vweird.f32 %v759
        %vm1049 = vweird.f32 %v1043
        %vm1050 = vmor %vm1048, %vm1049
        %v1051 = vsel %vm1050, %v1043, %v1047
        %v1052 = vand.u32 2147483647, %v759
        %vm1053 = vcmp.eq.f32.partialorder %v1052, 8.507059e+37
        %v1054 = vand.u32 %v759, 2147483648
        %v1055 = vor.u32 1.1754944e-38, %v1054
        %v1056 = vsel %vm1053, %v1055, %v1051
        %v1057 = vmul.f32 1.0, %v1056
        %v1058 = vrcp.pop %v760
        %v1059 = vmul.f32 %v760, %v1058
        %v1060 = vsub.f32 1.0, %v1059
        %v1061 = vmul.f32 %v1058, %v1060
        %v1062 = vadd.f32 %v1058, %v1061
        %vm1063 = vweird.f32 %v760
        %vm1064 = vweird.f32 %v1058
        %vm1065 = vmor %vm1063, %vm1064
        %v1066 = vsel %vm1065, %v1058, %v1062
        %v1067 = vand.u32 2147483647, %v760
        %vm1068 = vcmp.eq.f32.partialorder %v1067, 8.507059e+37
        %v1069 = vand.u32 %v760, 2147483648
        %v1070 = vor.u32 1.1754944e-38, %v1069
        %v1071 = vsel %vm1068, %v1070, %v1066
        %v1072 = vmul.f32 1.0, %v1071
        %v1073 = vrcp.pop %v761
        %v1074 = vmul.f32 %v761, %v1073
        %v1075 = vsub.f32 1.0, %v1074
        %v1076 = vmul.f32 %v1073, %v1075
        %v1077 = vadd.f32 %v1073, %v1076
        %vm1078 = vweird.f32 %v761
        %vm1079 = vweird.f32 %v1073
        %vm1080 = vmor %vm1078, %vm1079
        %v1081 = vsel %vm1080, %v1073, %v1077
        %v1082 = vand.u32 2147483647, %v761
        %vm1083 = vcmp.eq.f32.partialorder %v1082, 8.507059e+37
        %v1084 = vand.u32 %v761, 2147483648
        %v1085 = vor.u32 1.1754944e-38, %v1084
        %v1086 = vsel %vm1083, %v1085, %v1081
        %v1087 = vmul.f32 1.0, %v1086
        %v1088 = vrcp.pop %v762
        %v1089 = vmul.f32 %v762, %v1088
        %v1090 = vsub.f32 1.0, %v1089
        %v1091 = vmul.f32 %v1088, %v1090
        %v1092 = vadd.f32 %v1088, %v1091
        %vm1093 = vweird.f32 %v762
        %vm1094 = vweird.f32 %v1088
        %vm1095 = vmor %vm1093, %vm1094
        %v1096 = vsel %vm1095, %v1088, %v1092
        %v1097 = vand.u32 2147483647, %v762
        %vm1098 = vcmp.eq.f32.partialorder %v1097, 8.507059e+37
        %v1099 = vand.u32 %v762, 2147483648
        %v1100 = vor.u32 1.1754944e-38, %v1099
        %v1101 = vsel %vm1098, %v1100, %v1096
        %v1102 = vmul.f32 1.0, %v1101
        %v1103 = vrcp.pop %v763
        %v1104 = vmul.f32 %v763, %v1103
        %v1105 = vsub.f32 1.0, %v1104
        %v1106 = vmul.f32 %v1103, %v1105
        %v1107 = vadd.f32 %v1103, %v1106
        %vm1108 = vweird.f32 %v763
        %vm1109 = vweird.f32 %v1103
        %vm1110 = vmor %vm1108, %vm1109
        %v1111 = vsel %vm1110, %v1103, %v1107
        %v1112 = vand.u32 2147483647, %v763
        %vm1113 = vcmp.eq.f32.partialorder %v1112, 8.507059e+37
        %v1114 = vand.u32 %v763, 2147483648
        %v1115 = vor.u32 1.1754944e-38, %v1114
        %v1116 = vsel %vm1113, %v1115, %v1111
        %v1117 = vmul.f32 1.0, %v1116
        %v1118 = vrcp.pop %v764
        %v1119 = vmul.f32 %v764, %v1118
        %v1120 = vsub.f32 1.0, %v1119
        %v1121 = vmul.f32 %v1118, %v1120
        %v1122 = vadd.f32 %v1118, %v1121
        %vm1123 = vweird.f32 %v764
        %vm1124 = vweird.f32 %v1118
        %vm1125 = vmor %vm1123, %vm1124
        %v1126 = vsel %vm1125, %v1118, %v1122
        %v1127 = vand.u32 2147483647, %v764
        %vm1128 = vcmp.eq.f32.partialorder %v1127, 8.507059e+37
        %v1129 = vand.u32 %v764, 2147483648
        %v1130 = vor.u32 1.1754944e-38, %v1129
        %v1131 = vsel %vm1128, %v1130, %v1126
        %v1132 = vmul.f32 1.0, %v1131
        %v1133 = vrcp.pop %v765
        %v1134 = vmul.f32 %v765, %v1133
        %v1135 = vsub.f32 1.0, %v1134
        %v1136 = vmul.f32 %v1133, %v1135
        %v1137 = vadd.f32 %v1133, %v1136
        %vm1138 = vweird.f32 %v765
        %vm1139 = vweird.f32 %v1133
        %vm1140 = vmor %vm1138, %vm1139
        %v1141 = vsel %vm1140, %v1133, %v1137
        %v1142 = vand.u32 2147483647, %v765
        %vm1143 = vcmp.eq.f32.partialorder %v1142, 8.507059e+37
        %v1144 = vand.u32 %v765, 2147483648
        %v1145 = vor.u32 1.1754944e-38, %v1144
        %v1146 = vsel %vm1143, %v1145, %v1141
        %v1147 = vmul.f32 1.0, %v1146
        %v1148 = vrcp.pop %v766
        %v1149 = vmul.f32 %v766, %v1148
        %v1150 = vsub.f32 1.0, %v1149
        %v1151 = vmul.f32 %v1148, %v1150
        %v1152 = vadd.f32 %v1148, %v1151
        %vm1153 = vweird.f32 %v766
        %vm1154 = vweird.f32 %v1148
        %vm1155 = vmor %vm1153, %vm1154
        %v1156 = vsel %vm1155, %v1148, %v1152
        %v1157 = vand.u32 2147483647, %v766
        %vm1158 = vcmp.eq.f32.partialorder %v1157, 8.507059e+37
        %v1159 = vand.u32 %v766, 2147483648
        %v1160 = vor.u32 1.1754944e-38, %v1159
        %v1161 = vsel %vm1158, %v1160, %v1156
        %v1162 = vmul.f32 1.0, %v1161
        %v1163 = vrcp.pop %v767
        %v1164 = vmul.f32 %v767, %v1163
        %v1165 = vsub.f32 1.0, %v1164
        %v1166 = vmul.f32 %v1163, %v1165
        %v1167 = vadd.f32 %v1163, %v1166
        %vm1168 = vweird.f32 %v767
        %vm1169 = vweird.f32 %v1163
        %vm1170 = vmor %vm1168, %vm1169
        %v1171 = vsel %vm1170, %v1163, %v1167
        %v1172 = vand.u32 2147483647, %v767
        %vm1173 = vcmp.eq.f32.partialorder %v1172, 8.507059e+37
        %v1174 = vand.u32 %v767, 2147483648
        %v1175 = vor.u32 1.1754944e-38, %v1174
        %v1176 = vsel %vm1173, %v1175, %v1171
        %v1177 = vmul.f32 1.0, %v1176
        %v1178 = vrcp.pop %v768
        %v1179 = vmul.f32 %v768, %v1178
        %v1180 = vsub.f32 1.0, %v1179
        %v1181 = vmul.f32 %v1178, %v1180
        %v1182 = vadd.f32 %v1178, %v1181
        %vm1183 = vweird.f32 %v768
        %vm1184 = vweird.f32 %v1178
        %vm1185 = vmor %vm1183, %vm1184
        %v1186 = vsel %vm1185, %v1178, %v1182
        %v1187 = vand.u32 2147483647, %v768
        %vm1188 = vcmp.eq.f32.partialorder %v1187, 8.507059e+37
        %v1189 = vand.u32 %v768, 2147483648
        %v1190 = vor.u32 1.1754944e-38, %v1189
        %v1191 = vsel %vm1188, %v1190, %v1186
        %v1192 = vmul.f32 1.0, %v1191
        %v1193 = vrcp.pop %v769
        %v1194 = vmul.f32 %v769, %v1193
        %v1195 = vsub.f32 1.0, %v1194
        %v1196 = vmul.f32 %v1193, %v1195
        %v1197 = vadd.f32 %v1193, %v1196
        %vm1198 = vweird.f32 %v769
        %vm1199 = vweird.f32 %v1193
        %vm1200 = vmor %vm1198, %vm1199
        %v1201 = vsel %vm1200, %v1193, %v1197
        %v1202 = vand.u32 2147483647, %v769
        %vm1203 = vcmp.eq.f32.partialorder %v1202, 8.507059e+37
        %v1204 = vand.u32 %v769, 2147483648
        %v1205 = vor.u32 1.1754944e-38, %v1204
        %v1206 = vsel %vm1203, %v1205, %v1201
        %v1207 = vmul.f32 1.0, %v1206
        %v1208 = vrcp.pop %v770
        %v1209 = vmul.f32 %v770, %v1208
        %v1210 = vsub.f32 1.0, %v1209
        %v1211 = vmul.f32 %v1208, %v1210
        %v1212 = vadd.f32 %v1208, %v1211
        %vm1213 = vweird.f32 %v770
        %vm1214 = vweird.f32 %v1208
        %vm1215 = vmor %vm1213, %vm1214
        %v1216 = vsel %vm1215, %v1208, %v1212
        %v1217 = vand.u32 2147483647, %v770
        %vm1218 = vcmp.eq.f32.partialorder %v1217, 8.507059e+37
        %v1219 = vand.u32 %v770, 2147483648
        %v1220 = vor.u32 1.1754944e-38, %v1219
        %v1221 = vsel %vm1218, %v1220, %v1216
        %v1222 = vmul.f32 1.0, %v1221
        %v1223 = vrcp.pop %v771
        %v1224 = vmul.f32 %v771, %v1223
        %v1225 = vsub.f32 1.0, %v1224
        %v1226 = vmul.f32 %v1223, %v1225
        %v1227 = vadd.f32 %v1223, %v1226
        %vm1228 = vweird.f32 %v771
        %vm1229 = vweird.f32 %v1223
        %vm1230 = vmor %vm1228, %vm1229
        %v1231 = vsel %vm1230, %v1223, %v1227
        %v1232 = vand.u32 2147483647, %v771
        %vm1233 = vcmp.eq.f32.partialorder %v1232, 8.507059e+37
        %v1234 = vand.u32 %v771, 2147483648
        %v1235 = vor.u32 1.1754944e-38, %v1234
        %v1236 = vsel %vm1233, %v1235, %v1231
        %v1237 = vmul.f32 1.0, %v1236
        %v1238 = vrcp.pop %v772
        %v1239 = vmul.f32 %v772, %v1238
        %v1240 = vsub.f32 1.0, %v1239
        %v1241 = vmul.f32 %v1238, %v1240
        %v1242 = vadd.f32 %v1238, %v1241
        %vm1243 = vweird.f32 %v772
        %vm1244 = vweird.f32 %v1238
        %vm1245 = vmor %vm1243, %vm1244
        %v1246 = vsel %vm1245, %v1238, %v1242
        %v1247 = vand.u32 2147483647, %v772
        %vm1248 = vcmp.eq.f32.partialorder %v1247, 8.507059e+37
        %v1249 = vand.u32 %v772, 2147483648
        %v1250 = vor.u32 1.1754944e-38, %v1249
        %v1251 = vsel %vm1248, %v1250, %v1246
        %v1252 = vmul.f32 1.0, %v1251
        %vm1253 = vcmask 7168
        %1254 = vst.msk [vmem:[%s227] sm:$0xff] %vm1253, %v787
        %1255 = vst.msk [vmem:[%s227 + $0x8] sm:$0xff] %vm1253, %v802
        %1256 = vst.msk [vmem:[%s227 + $0x10] sm:$0xff] %vm1253, %v817
        %1257 = vst.msk [vmem:[%s227 + $0x18] sm:$0xff] %vm1253, %v832
        %1258 = vst.msk [vmem:[%s227 + $0x20] sm:$0xff] %vm1253, %v847
        %1259 = vst.msk [vmem:[%s227 + $0x28] sm:$0xff] %vm1253, %v862
        %1260 = vst.msk [vmem:[%s227 + $0x30] sm:$0xff] %vm1253, %v877
        %1261 = vst.msk [vmem:[%s227 + $0x38] sm:$0xff] %vm1253, %v892
        %1262 = vst.msk [vmem:[%s227 + $0x40] sm:$0xff] %vm1253, %v907
        %1263 = vst.msk [vmem:[%s227 + $0x48] sm:$0xff] %vm1253, %v922
        %1264 = vst.msk [vmem:[%s227 + $0x50] sm:$0xff] %vm1253, %v937
        %1265 = vst.msk [vmem:[%s227 + $0x58] sm:$0xff] %vm1253, %v952
        %1266 = vst.msk [vmem:[%s227 + $0x60] sm:$0xff] %vm1253, %v967
        %1267 = vst.msk [vmem:[%s227 + $0x68] sm:$0xff] %vm1253, %v982
        %1268 = vst.msk [vmem:[%s227 + $0x70] sm:$0xff] %vm1253, %v997
        %1269 = vst.msk [vmem:[%s227 + $0x78] sm:$0xff] %vm1253, %v1012
        %1270 = vst.msk [vmem:[%s227 + $0x80] sm:$0xff] %vm1253, %v1027
        %1271 = vst.msk [vmem:[%s227 + $0x88] sm:$0xff] %vm1253, %v1042
        %1272 = vst.msk [vmem:[%s227 + $0x90] sm:$0xff] %vm1253, %v1057
        %1273 = vst.msk [vmem:[%s227 + $0x98] sm:$0xff] %vm1253, %v1072
        %1274 = vst.msk [vmem:[%s227 + $0xa0] sm:$0xff] %vm1253, %v1087
        %1275 = vst.msk [vmem:[%s227 + $0xa8] sm:$0xff] %vm1253, %v1102
        %1276 = vst.msk [vmem:[%s227 + $0xb0] sm:$0xff] %vm1253, %v1117
        %1277 = vst.msk [vmem:[%s227 + $0xb8] sm:$0xff] %vm1253, %v1132
        %1278 = vst.msk [vmem:[%s227 + $0xc0] sm:$0xff] %vm1253, %v1147
        %1279 = vst.msk [vmem:[%s227 + $0xc8] sm:$0xff] %vm1253, %v1162
        %1280 = vst.msk [vmem:[%s227 + $0xd0] sm:$0xff] %vm1253, %v1177
        %1281 = vst.msk [vmem:[%s227 + $0xd8] sm:$0xff] %vm1253, %v1192
        %1282 = vst.msk [vmem:[%s227 + $0xe0] sm:$0xff] %vm1253, %v1207
        %1283 = vst.msk [vmem:[%s227 + $0xe8] sm:$0xff] %vm1253, %v1222
        %1284 = vst.msk [vmem:[%s227 + $0xf0] sm:$0xff] %vm1253, %v1237
        %1285 = vst.msk [vmem:[%s227 + $0xf8] sm:$0xff] %vm1253, %v1252
        %s1286 = sand.u32 %s135, 1
        %s1287 = sand.u32 %s135, 1
        %s1288 = smul.addr %s1287, 256
        %s1289 = scalar_lea.vmem [#allocation3], %s1288
        // Predicated region
        $region41: #{shallow_nn_forward.1} parent=39 // pred_check
          %p1290 = pneg %p145
        $region42: #{shallow_nn_forward.1} parent=39 // pred_check_branch
          %1292 = sbr.rel (%p1290) target = $region44
        $region43: #{shallow_nn_forward.1} parent=39 // pred_region
          %s1293 = smul.u32 32, %s17
          %s1294 = ssub.s32 125, %s1293
          %p1295 = scmp.lt.s32.totalorder %s1294, 32
          %s1296 = scalar_select %p1295, %s1294, 32
          %s1297 = smul.u32 8, %s1296
          %p1298 = scmp.ne.s32.totalorder 0, %s1297
          %s1299 = smul.addr %s1293, 8
          %s1300 = scalar_lea.vmem %s5, %s1299
          // Predicated region
          $region45: #{shallow_nn_forward.1} parent=43 // pred_check
            %p1301 = pneg %p1298
          $region46: #{shallow_nn_forward.1} parent=43 // pred_check_branch
            %1303 = sbr.rel (%p1301) target = $region48
          $region47: #{shallow_nn_forward.1} parent=43 // pred_region
            // Predicated region
            $region49: #{shallow_nn_forward.1} parent=47 // pred_check
              _
            $region50: #{shallow_nn_forward.1} parent=47 // pred_check_branch
              %1305 = sbr.rel (0) target = $region52
            $region51: #{shallow_nn_forward.1} parent=47 // pred_region
              // Predicated region
              $region71: #{shallow_nn_forward.1} parent=51 // pred_check
                _
              $region72: #{shallow_nn_forward.1} parent=51 // pred_check_branch
                %1417 = sbr.rel (0) target = $region74
              $region73: #{shallow_nn_forward.1} parent=51 // pred_region
                %s1418 = sshrl.u32 %s1296, 5
                // While loop
                $region75: #{shallow_nn_forward.1} parent=73 // loop_pre_header
                  _
                $region76: #{shallow_nn_forward.1} parent=73 // loop_header
                  %s1420 = sphi 0, %s1422
                  %p1421 = scmp.ge.s32.totalorder %s1420, %s1418
                  %s1425 = sphi 0, %s1494
                  %s1426 = sphi %s1289, %s1497
                  %s1427 = sphi %s1300, %s1498
                $region77: #{shallow_nn_forward.1} parent=73 // loop_header_branch
                  %1424 = sbr.rel (%p1421) target = $region81
                $region78: #{shallow_nn_forward.1} parent=73 // loop_body
                  %v1428 = vld [vmem:[%s1426] sm:$0xff]
                  %1429 = vst [vmem:[%s1427] sm:$0xff] %v1428
                  %v1430 = vld [vmem:[%s1426 + $0x8] sm:$0xff]
                  %1431 = vst [vmem:[%s1427 + $0x8] sm:$0xff] %v1430
                  %v1432 = vld [vmem:[%s1426 + $0x10] sm:$0xff]
                  %1433 = vst [vmem:[%s1427 + $0x10] sm:$0xff] %v1432
                  %v1434 = vld [vmem:[%s1426 + $0x18] sm:$0xff]
                  %1435 = vst [vmem:[%s1427 + $0x18] sm:$0xff] %v1434
                  %v1436 = vld [vmem:[%s1426 + $0x20] sm:$0xff]
                  %1437 = vst [vmem:[%s1427 + $0x20] sm:$0xff] %v1436
                  %v1438 = vld [vmem:[%s1426 + $0x28] sm:$0xff]
                  %1439 = vst [vmem:[%s1427 + $0x28] sm:$0xff] %v1438
                  %v1440 = vld [vmem:[%s1426 + $0x30] sm:$0xff]
                  %1441 = vst [vmem:[%s1427 + $0x30] sm:$0xff] %v1440
                  %v1442 = vld [vmem:[%s1426 + $0x38] sm:$0xff]
                  %1443 = vst [vmem:[%s1427 + $0x38] sm:$0xff] %v1442
                  %v1444 = vld [vmem:[%s1426 + $0x40] sm:$0xff]
                  %1445 = vst [vmem:[%s1427 + $0x40] sm:$0xff] %v1444
                  %v1446 = vld [vmem:[%s1426 + $0x48] sm:$0xff]
                  %1447 = vst [vmem:[%s1427 + $0x48] sm:$0xff] %v1446
                  %v1448 = vld [vmem:[%s1426 + $0x50] sm:$0xff]
                  %1449 = vst [vmem:[%s1427 + $0x50] sm:$0xff] %v1448
                  %v1450 = vld [vmem:[%s1426 + $0x58] sm:$0xff]
                  %1451 = vst [vmem:[%s1427 + $0x58] sm:$0xff] %v1450
                  %v1452 = vld [vmem:[%s1426 + $0x60] sm:$0xff]
                  %1453 = vst [vmem:[%s1427 + $0x60] sm:$0xff] %v1452
                  %v1454 = vld [vmem:[%s1426 + $0x68] sm:$0xff]
                  %1455 = vst [vmem:[%s1427 + $0x68] sm:$0xff] %v1454
                  %v1456 = vld [vmem:[%s1426 + $0x70] sm:$0xff]
                  %1457 = vst [vmem:[%s1427 + $0x70] sm:$0xff] %v1456
                  %v1458 = vld [vmem:[%s1426 + $0x78] sm:$0xff]
                  %1459 = vst [vmem:[%s1427 + $0x78] sm:$0xff] %v1458
                  %v1460 = vld [vmem:[%s1426 + $0x80] sm:$0xff]
                  %1461 = vst [vmem:[%s1427 + $0x80] sm:$0xff] %v1460
                  %v1462 = vld [vmem:[%s1426 + $0x88] sm:$0xff]
                  %1463 = vst [vmem:[%s1427 + $0x88] sm:$0xff] %v1462
                  %v1464 = vld [vmem:[%s1426 + $0x90] sm:$0xff]
                  %1465 = vst [vmem:[%s1427 + $0x90] sm:$0xff] %v1464
                  %v1466 = vld [vmem:[%s1426 + $0x98] sm:$0xff]
                  %1467 = vst [vmem:[%s1427 + $0x98] sm:$0xff] %v1466
                  %v1468 = vld [vmem:[%s1426 + $0xa0] sm:$0xff]
                  %1469 = vst [vmem:[%s1427 + $0xa0] sm:$0xff] %v1468
                  %v1470 = vld [vmem:[%s1426 + $0xa8] sm:$0xff]
                  %1471 = vst [vmem:[%s1427 + $0xa8] sm:$0xff] %v1470
                  %v1472 = vld [vmem:[%s1426 + $0xb0] sm:$0xff]
                  %1473 = vst [vmem:[%s1427 + $0xb0] sm:$0xff] %v1472
                  %v1474 = vld [vmem:[%s1426 + $0xb8] sm:$0xff]
                  %1475 = vst [vmem:[%s1427 + $0xb8] sm:$0xff] %v1474
                  %v1476 = vld [vmem:[%s1426 + $0xc0] sm:$0xff]
                  %1477 = vst [vmem:[%s1427 + $0xc0] sm:$0xff] %v1476
                  %v1478 = vld [vmem:[%s1426 + $0xc8] sm:$0xff]
                  %1479 = vst [vmem:[%s1427 + $0xc8] sm:$0xff] %v1478
                  %v1480 = vld [vmem:[%s1426 + $0xd0] sm:$0xff]
                  %1481 = vst [vmem:[%s1427 + $0xd0] sm:$0xff] %v1480
                  %v1482 = vld [vmem:[%s1426 + $0xd8] sm:$0xff]
                  %1483 = vst [vmem:[%s1427 + $0xd8] sm:$0xff] %v1482
                  %v1484 = vld [vmem:[%s1426 + $0xe0] sm:$0xff]
                  %1485 = vst [vmem:[%s1427 + $0xe0] sm:$0xff] %v1484
                  %v1486 = vld [vmem:[%s1426 + $0xe8] sm:$0xff]
                  %1487 = vst [vmem:[%s1427 + $0xe8] sm:$0xff] %v1486
                  %v1488 = vld [vmem:[%s1426 + $0xf0] sm:$0xff]
                  %1489 = vst [vmem:[%s1427 + $0xf0] sm:$0xff] %v1488
                  %v1490 = vld [vmem:[%s1426 + $0xf8] sm:$0xff]
                  %1491 = vst [vmem:[%s1427 + $0xf8] sm:$0xff] %v1490
                  %s1492 = sadd.s32 1, %s1425
                  %p1493 = scmp.ge.s32.totalorder %s1492, %s1418
                  %s1494 = scalar_select %p1493, 0, %s1492
                  %s1495 = smul.u32 %s1494, 256
                  %s1496 = smul.u32 %s1494, 256
                  %s1497 = scalar_lea.vmem %s1289, %s1495 [#allocation3]
                  %s1498 = scalar_lea.vmem %s1300, %s1496
                $region79: #{shallow_nn_forward.1} parent=73 // loop_footer
                  %s1422 = sadd.s32 %s1420, 1
                $region80: #{shallow_nn_forward.1} parent=73 // loop_footer_branch
                  %1419 = sbr.rel target = $region76
                $region81: #{shallow_nn_forward.1} parent=73 // loop_exit
                  _
                %s1499 = sshrl.u32 %s1296, 5
                %s1500 = sand.u32 %s1296, 31
                %s1501 = smul.u32 %s1499, 32
                %s1502 = smul.u32 8, %s1501
                %s1503 = scalar_lea.vmem %s1289, %s1502 [#allocation3]
                %s1504 = smul.u32 8, %s1501
                %s1505 = scalar_lea.vmem %s1300, %s1504
                // While loop
                $region82: #{shallow_nn_forward.1} parent=73 // loop_pre_header
                  _
                $region83: #{shallow_nn_forward.1} parent=73 // loop_header
                  %s1507 = sphi 0, %s1509
                  %p1508 = scmp.ge.s32.totalorder %s1507, %s1500
                  %s1512 = sphi 0, %s1519
                  %s1513 = sphi %s1503, %s1522
                  %s1514 = sphi %s1505, %s1523
                $region84: #{shallow_nn_forward.1} parent=73 // loop_header_branch
                  %1511 = sbr.rel (%p1508) target = $region88
                $region85: #{shallow_nn_forward.1} parent=73 // loop_body
                  %v1515 = vld [vmem:[%s1513] sm:$0xff]
                  %1516 = vst [vmem:[%s1514] sm:$0xff] %v1515
                  %s1517 = sadd.s32 1, %s1512
                  %p1518 = scmp.ge.s32.totalorder %s1517, %s1500
                  %s1519 = scalar_select %p1518, 0, %s1517
                  %s1520 = smul.u32 %s1519, 8
                  %s1521 = smul.u32 %s1519, 8
                  %s1522 = scalar_lea.vmem %s1503, %s1520 [#allocation3]
                  %s1523 = scalar_lea.vmem %s1505, %s1521
                $region86: #{shallow_nn_forward.1} parent=73 // loop_footer
                  %s1509 = sadd.s32 %s1507, 1
                $region87: #{shallow_nn_forward.1} parent=73 // loop_footer_branch
                  %1506 = sbr.rel target = $region83
                $region88: #{shallow_nn_forward.1} parent=73 // loop_exit
                  _
              $region74: #{shallow_nn_forward.1} parent=51 // pred_fallthru
                _
              // Predicated region
              $region89: #{shallow_nn_forward.1} parent=51 // pred_check
                _
              $region90: #{shallow_nn_forward.1} parent=51 // pred_check_branch
                %1525 = sbr.rel target = $region92
              $region91: #{shallow_nn_forward.1} parent=51 // pred_region
                _
              $region92: #{shallow_nn_forward.1} parent=51 // pred_fallthru
                _
            $region52: #{shallow_nn_forward.1} parent=47 // pred_fallthru
              _
            // Predicated region
            $region53: #{shallow_nn_forward.1} parent=47 // pred_check
              _
            $region54: #{shallow_nn_forward.1} parent=47 // pred_check_branch
              %1307 = sbr.rel target = $region56
            $region55: #{shallow_nn_forward.1} parent=47 // pred_region
              %s1309 = ssub.s32 256, 1
              %s1310 = sshrl.u32 %s1296, 5
              // While loop
              $region57: #{shallow_nn_forward.1} parent=55 // loop_pre_header
                _
              $region58: #{shallow_nn_forward.1} parent=55 // loop_header
                %s1312 = sphi 0, %s1314
                %p1313 = scmp.ge.s32.totalorder %s1312, %s1310
                %s1317 = sphi 0, %s1386
                %s1318 = sphi %s1289, %s1389
                %s1319 = sphi %s1300, %s1390
              $region59: #{shallow_nn_forward.1} parent=55 // loop_header_branch
                %1316 = sbr.rel (%p1313) target = $region63
              $region60: #{shallow_nn_forward.1} parent=55 // loop_body
                %v1320 = vld [vmem:[%s1318] sm:%s1309]
                %1321 = vst [vmem:[%s1319] sm:%s1309] %v1320
                %v1322 = vld [vmem:[%s1318 + $0x8] sm:%s1309]
                %1323 = vst [vmem:[%s1319 + $0x8] sm:%s1309] %v1322
                %v1324 = vld [vmem:[%s1318 + $0x10] sm:%s1309]
                %1325 = vst [vmem:[%s1319 + $0x10] sm:%s1309] %v1324
                %v1326 = vld [vmem:[%s1318 + $0x18] sm:%s1309]
                %1327 = vst [vmem:[%s1319 + $0x18] sm:%s1309] %v1326
                %v1328 = vld [vmem:[%s1318 + $0x20] sm:%s1309]
                %1329 = vst [vmem:[%s1319 + $0x20] sm:%s1309] %v1328
                %v1330 = vld [vmem:[%s1318 + $0x28] sm:%s1309]
                %1331 = vst [vmem:[%s1319 + $0x28] sm:%s1309] %v1330
                %v1332 = vld [vmem:[%s1318 + $0x30] sm:%s1309]
                %1333 = vst [vmem:[%s1319 + $0x30] sm:%s1309] %v1332
                %v1334 = vld [vmem:[%s1318 + $0x38] sm:%s1309]
                %1335 = vst [vmem:[%s1319 + $0x38] sm:%s1309] %v1334
                %v1336 = vld [vmem:[%s1318 + $0x40] sm:%s1309]
                %1337 = vst [vmem:[%s1319 + $0x40] sm:%s1309] %v1336
                %v1338 = vld [vmem:[%s1318 + $0x48] sm:%s1309]
                %1339 = vst [vmem:[%s1319 + $0x48] sm:%s1309] %v1338
                %v1340 = vld [vmem:[%s1318 + $0x50] sm:%s1309]
                %1341 = vst [vmem:[%s1319 + $0x50] sm:%s1309] %v1340
                %v1342 = vld [vmem:[%s1318 + $0x58] sm:%s1309]
                %1343 = vst [vmem:[%s1319 + $0x58] sm:%s1309] %v1342
                %v1344 = vld [vmem:[%s1318 + $0x60] sm:%s1309]
                %1345 = vst [vmem:[%s1319 + $0x60] sm:%s1309] %v1344
                %v1346 = vld [vmem:[%s1318 + $0x68] sm:%s1309]
                %1347 = vst [vmem:[%s1319 + $0x68] sm:%s1309] %v1346
                %v1348 = vld [vmem:[%s1318 + $0x70] sm:%s1309]
                %1349 = vst [vmem:[%s1319 + $0x70] sm:%s1309] %v1348
                %v1350 = vld [vmem:[%s1318 + $0x78] sm:%s1309]
                %1351 = vst [vmem:[%s1319 + $0x78] sm:%s1309] %v1350
                %v1352 = vld [vmem:[%s1318 + $0x80] sm:%s1309]
                %1353 = vst [vmem:[%s1319 + $0x80] sm:%s1309] %v1352
                %v1354 = vld [vmem:[%s1318 + $0x88] sm:%s1309]
                %1355 = vst [vmem:[%s1319 + $0x88] sm:%s1309] %v1354
                %v1356 = vld [vmem:[%s1318 + $0x90] sm:%s1309]
                %1357 = vst [vmem:[%s1319 + $0x90] sm:%s1309] %v1356
                %v1358 = vld [vmem:[%s1318 + $0x98] sm:%s1309]
                %1359 = vst [vmem:[%s1319 + $0x98] sm:%s1309] %v1358
                %v1360 = vld [vmem:[%s1318 + $0xa0] sm:%s1309]
                %1361 = vst [vmem:[%s1319 + $0xa0] sm:%s1309] %v1360
                %v1362 = vld [vmem:[%s1318 + $0xa8] sm:%s1309]
                %1363 = vst [vmem:[%s1319 + $0xa8] sm:%s1309] %v1362
                %v1364 = vld [vmem:[%s1318 + $0xb0] sm:%s1309]
                %1365 = vst [vmem:[%s1319 + $0xb0] sm:%s1309] %v1364
                %v1366 = vld [vmem:[%s1318 + $0xb8] sm:%s1309]
                %1367 = vst [vmem:[%s1319 + $0xb8] sm:%s1309] %v1366
                %v1368 = vld [vmem:[%s1318 + $0xc0] sm:%s1309]
                %1369 = vst [vmem:[%s1319 + $0xc0] sm:%s1309] %v1368
                %v1370 = vld [vmem:[%s1318 + $0xc8] sm:%s1309]
                %1371 = vst [vmem:[%s1319 + $0xc8] sm:%s1309] %v1370
                %v1372 = vld [vmem:[%s1318 + $0xd0] sm:%s1309]
                %1373 = vst [vmem:[%s1319 + $0xd0] sm:%s1309] %v1372
                %v1374 = vld [vmem:[%s1318 + $0xd8] sm:%s1309]
                %1375 = vst [vmem:[%s1319 + $0xd8] sm:%s1309] %v1374
                %v1376 = vld [vmem:[%s1318 + $0xe0] sm:%s1309]
                %1377 = vst [vmem:[%s1319 + $0xe0] sm:%s1309] %v1376
                %v1378 = vld [vmem:[%s1318 + $0xe8] sm:%s1309]
                %1379 = vst [vmem:[%s1319 + $0xe8] sm:%s1309] %v1378
                %v1380 = vld [vmem:[%s1318 + $0xf0] sm:%s1309]
                %1381 = vst [vmem:[%s1319 + $0xf0] sm:%s1309] %v1380
                %v1382 = vld [vmem:[%s1318 + $0xf8] sm:%s1309]
                %1383 = vst [vmem:[%s1319 + $0xf8] sm:%s1309] %v1382
                %s1384 = sadd.s32 1, %s1317
                %p1385 = scmp.ge.s32.totalorder %s1384, %s1310
                %s1386 = scalar_select %p1385, 0, %s1384
                %s1387 = smul.u32 %s1386, 256
                %s1388 = smul.u32 %s1386, 256
                %s1389 = scalar_lea.vmem %s1289, %s1387 [#allocation3]
                %s1390 = scalar_lea.vmem %s1300, %s1388
              $region61: #{shallow_nn_forward.1} parent=55 // loop_footer
                %s1314 = sadd.s32 %s1312, 1
              $region62: #{shallow_nn_forward.1} parent=55 // loop_footer_branch
                %1311 = sbr.rel target = $region58
              $region63: #{shallow_nn_forward.1} parent=55 // loop_exit
                _
              %s1391 = sshrl.u32 %s1296, 5
              %s1392 = sand.u32 %s1296, 31
              %s1393 = smul.u32 %s1391, 32
              %s1394 = smul.u32 8, %s1393
              %s1395 = scalar_lea.vmem %s1289, %s1394 [#allocation3]
              %s1396 = smul.u32 8, %s1393
              %s1397 = scalar_lea.vmem %s1300, %s1396
              // While loop
              $region64: #{shallow_nn_forward.1} parent=55 // loop_pre_header
                _
              $region65: #{shallow_nn_forward.1} parent=55 // loop_header
                %s1399 = sphi 0, %s1401
                %p1400 = scmp.ge.s32.totalorder %s1399, %s1392
                %s1404 = sphi 0, %s1411
                %s1405 = sphi %s1395, %s1414
                %s1406 = sphi %s1397, %s1415
              $region66: #{shallow_nn_forward.1} parent=55 // loop_header_branch
                %1403 = sbr.rel (%p1400) target = $region70
              $region67: #{shallow_nn_forward.1} parent=55 // loop_body
                %v1407 = vld [vmem:[%s1405] sm:%s1309]
                %1408 = vst [vmem:[%s1406] sm:%s1309] %v1407
                %s1409 = sadd.s32 1, %s1404
                %p1410 = scmp.ge.s32.totalorder %s1409, %s1392
                %s1411 = scalar_select %p1410, 0, %s1409
                %s1412 = smul.u32 %s1411, 8
                %s1413 = smul.u32 %s1411, 8
                %s1414 = scalar_lea.vmem %s1395, %s1412 [#allocation3]
                %s1415 = scalar_lea.vmem %s1397, %s1413
              $region68: #{shallow_nn_forward.1} parent=55 // loop_footer
                %s1401 = sadd.s32 %s1399, 1
              $region69: #{shallow_nn_forward.1} parent=55 // loop_footer_branch
                %1398 = sbr.rel target = $region65
              $region70: #{shallow_nn_forward.1} parent=55 // loop_exit
                _
            $region56: #{shallow_nn_forward.1} parent=47 // pred_fallthru
              _
          $region48: #{shallow_nn_forward.1} parent=43 // pred_fallthru
            _
          %1526 = vnop
        $region44: #{shallow_nn_forward.1} parent=39 // pred_fallthru
          _
      $region40: #{shallow_nn_forward.1} parent=5 // pred_fallthru
        _
      %p1527 = scmp.le.s32.totalorder 2, %s12
      // Predicated region
      $region93: #{shallow_nn_forward.1} parent=5 // pred_check
        %p1528 = pneg %p1527
      $region94: #{shallow_nn_forward.1} parent=5 // pred_check_branch
        %1530 = sbr.rel (%p1528) target = $region96
      $region95: #{shallow_nn_forward.1} parent=5 // pred_region
        %s1531 = ssub.s32 %s12, 2
        // Predicated region
        $region97: #{shallow_nn_forward.1} parent=95 // pred_check
          %p1532 = pneg %p151
        $region98: #{shallow_nn_forward.1} parent=95 // pred_check_branch
          %1534 = sbr.rel (%p1532) target = $region100
        $region99: #{shallow_nn_forward.1} parent=95 // pred_region
          %s1535 = sand.u32 %s136, 1
          %s1536 = sand.u32 %s136, 1
          %s1537 = smul.addr %s1536, 256
          %s1538 = scalar_lea.vmem [#allocation3], %s1537
        $region100: #{shallow_nn_forward.1} parent=95 // pred_fallthru
          _
      $region96: #{shallow_nn_forward.1} parent=5 // pred_fallthru
        _
    $region6: #{shallow_nn_forward.1} parent=1 // loop_footer
      %s16 = sadd.s32 1, %s12
    $region7: #{shallow_nn_forward.1} parent=1 // loop_footer_branch
      %11 = sbr.rel target = $region3
    $region8: #{shallow_nn_forward.1} parent=1 // loop_exit
      _

</llo_original>
